<compile_context>
chip_gen: v7x
topology: tpu7x:2x2x1
jax: 0.10.0
libtpu: 0.0.40
codegen_flags: <defaults>
</compile_context>

<pallas_src>
import functools

import jax
import jax.numpy as jnp
from jax.experimental import pallas as pl
from jax.experimental.pallas import tpu as pltpu

# ---------------- module configuration ----------------
B, C_IN, H, W = 2, 8, 16, 16
C_OUT = 8
EXP = 16
K = 3            # depthwise kernel size
STRIDE = 1       # stride 1 -> residual connection
SE_RED = 4       # SEModule reduction
EPS = 1e-5

# ---------------- parameter-slab layout (one (16, 128) f32 slab, one DMA) ----
SLAB_ROWS, SLAB_COLS = EXP, 128
W1_COL = 0                      # w1t   (EXP, C_IN)        cols  0:8
W3_COL = 8                      # w3t   (C_OUT, EXP)       cols  8:24 (rows 0:8)
SE1_COL = 24                    # wse1t (EXP//r, EXP)      cols 24:40 (rows 0:4)
SE2_COL = 40                    # wse2t (EXP, EXP//r)      cols 40:44
DW_COL = 48                     # dw    (EXP, K*K)         cols 48:57
G1_COL, B1_COL = 64, 65         # BN1 gamma/beta           (rows 0:EXP)
G2_COL, B2_COL = 66, 67         # BN2 gamma/beta           (rows 0:EXP)
G3_COL, B3_COL = 68, 69         # BN3 gamma/beta           (rows 0:C_OUT)


def _hswish(v):
    return v * (jnp.clip(v + 3.0, 0.0, 6.0) * (1.0 / 6.0))


def _hsigmoid(v):
    return jnp.clip(v + 3.0, 0.0, 6.0) * (1.0 / 6.0)


# ---------------- fused kernel ----------------
def mobile_bottleneck_kernel(x_ref, p_ref, o_ref, *, height, width):
    bsz, cin, s = x_ref.shape            # (B, C_IN, H*W); S = 256 lane-dense
    cout = o_ref.shape[1]
    s2 = bsz * s                          # both images concatenated on lanes
    inv_n = 1.0 / s2                      # BN stats over batch * spatial
    inv_s = 1.0 / s                       # SE pool over one image

    # ---- parameters: static slices of the single VMEM slab -----------------
    w1t = p_ref[:, W1_COL:W1_COL + cin]                    # (EXP, C_IN)
    w3t = p_ref[0:cout, W3_COL:W3_COL + EXP]               # (C_OUT, EXP)
    wse1 = p_ref[0:EXP // SE_RED, SE1_COL:SE1_COL + EXP]   # (EXP//r, EXP)
    wse2 = p_ref[:, SE2_COL:SE2_COL + EXP // SE_RED]       # (EXP, EXP//r)
    g1 = p_ref[:, G1_COL:G1_COL + 1]
    b1 = p_ref[:, B1_COL:B1_COL + 1]
    g2 = p_ref[:, G2_COL:G2_COL + 1]
    b2 = p_ref[:, B2_COL:B2_COL + 1]
    g3 = p_ref[0:cout, G3_COL:G3_COL + 1]
    b3 = p_ref[0:cout, B3_COL:B3_COL + 1]

    def bn(y, gamma, beta):
        """Training-mode BatchNorm on a (CH, B*S) block (biased variance)."""
        mu = jnp.sum(y, axis=1, keepdims=True) * inv_n
        yc = y - mu
        var = jnp.sum(yc * yc, axis=1, keepdims=True) * inv_n
        return yc * (gamma * jax.lax.rsqrt(var + EPS)) + beta

    # ---- 1x1 expand conv -> BN1 -> h_swish (one matmul for both images) ----
    x_cat = jnp.concatenate([x_ref[b] for b in range(bsz)], axis=1)  # (C_IN, B*S)
    y = jnp.dot(w1t, x_cat, preferred_element_type=jnp.float32)      # (EXP, B*S)
    y = _hswish(bn(y, g1, b1))

    # ---- depthwise 3x3, stride 1, pad 1: lane roll + hoisted edge masks ----
    # Lane index p = b*S + h*width + w; a (oy, ox) tap is a lane shift by
    # d = oy*width + ox.  Positions whose source falls off the image edge are
    # masked to zero (same as the zero-padded conv); because |d| <= width+1 < S
    # the mask also covers any wrap across the image seam / buffer end.
    lane = jax.lax.broadcasted_iota(jnp.int32, (1, s2), 1)
    log2w = (width - 1).bit_length()           # width, S must be powers of two
    hh = (lane & (s - 1)) >> log2w
    ww = lane & (width - 1)
    row_ok = {-1: hh >= 1, 0: None, 1: hh < height - 1}
    col_ok = {-1: ww >= 1, 0: None, 1: ww < width - 1}

    acc = None
    for t in range(K * K):
        oy, ox = t // K - 1, t % K - 1
        d = oy * width + ox
        src = y if d == 0 else pltpu.roll(y, shift=(-d) % s2, axis=1)
        r, c = row_ok[oy], col_ok[ox]
        valid = r if c is None else (c if r is None else (r & c))
        if valid is not None:
            src = jnp.where(valid, src, 0.0)
        tap = src * p_ref[:, DW_COL + t:DW_COL + t + 1]     # (EXP, B*S)
        acc = tap if acc is None else acc + tap

    # ---- BN2 -> SE (per-image lane-slice pooling) -> h_swish ----------------
    z = bn(acc, g2, b2)                                     # (EXP, B*S)
    pooled = jnp.concatenate(
        [jnp.sum(z[:, b * s:(b + 1) * s], axis=1, keepdims=True) * inv_s
         for b in range(bsz)], axis=1)                      # (EXP, B)
    hid = jnp.maximum(
        jnp.dot(wse1, pooled, preferred_element_type=jnp.float32), 0.0)
    se = _hsigmoid(jnp.dot(wse2, hid, preferred_element_type=jnp.float32))
    se_lane = se[:, 0:1]                                    # (EXP, 1) -> (EXP, B*S)
    for b in range(1, bsz):
        se_lane = jnp.where(lane >= b * s, se[:, b:b + 1], se_lane)
    z = _hswish(z * se_lane)

    # ---- 1x1 project conv -> BN3 -> residual (x re-read, not kept live) ----
    y3 = bn(jnp.dot(w3t, z, preferred_element_type=jnp.float32), g3, b3)
    for b in range(bsz):
        o_ref[b] = x_ref[b] + y3[:, b * s:(b + 1) * s]


# ---------------- wrapper ----------------
def pack_params(p):
    """Pack all 11 small parameter tensors into one lane-dense (16,128) slab."""
    slab = jnp.zeros((SLAB_ROWS, SLAB_COLS), jnp.float32)
    slab = slab.at[:EXP, W1_COL:W1_COL + C_IN].set(p["w1t"])
    slab = slab.at[:C_OUT, W3_COL:W3_COL + EXP].set(p["w3t"])
    slab = slab.at[:EXP // SE_RED, SE1_COL:SE1_COL + EXP].set(p["wse1t"])
    slab = slab.at[:EXP, SE2_COL:SE2_COL + EXP // SE_RED].set(p["wse2t"])
    slab = slab.at[:EXP, DW_COL:DW_COL + K * K].set(p["dw"])
    slab = slab.at[:EXP, G1_COL].set(p["g1"])
    slab = slab.at[:EXP, B1_COL].set(p["b1"])
    slab = slab.at[:EXP, G2_COL].set(p["g2"])
    slab = slab.at[:EXP, B2_COL].set(p["b2"])
    slab = slab.at[:C_OUT, G3_COL].set(p["g3"])
    slab = slab.at[:C_OUT, B3_COL].set(p["b3"])
    return slab


def mobile_bottleneck(x_nchw, pslab):
    b, cin, h, w = x_nchw.shape
    s = h * w
    assert (w & (w - 1)) == 0 and (s & (s - 1)) == 0, \
        "kernel assumes W and H*W are powers of two"

    # NCHW -> (B, C, H*W) is a free contiguous reshape (no transpose, no pad).
    x3 = x_nchw.reshape(b, cin, s)

    vmem = pl.BlockSpec(memory_space=pltpu.MemorySpace.VMEM)
    out = pl.pallas_call(
        functools.partial(mobile_bottleneck_kernel, height=h, width=w),
        out_shape=jax.ShapeDtypeStruct((b, C_OUT, s), jnp.float32),
        in_specs=[vmem, vmem],          # 2 operands -> 2 DMAs (was 12)
        out_specs=vmem,
    )(x3, pslab)

    return out.reshape(b, C_OUT, h, w)


# ---------------- pure-JAX float32 reference (NCHW in/out) ----------------
def reference(x_nchw, p):
    hi = jax.lax.Precision.HIGHEST

    def bn(y, g, b_):
        mu = jnp.mean(y, axis=(0, 2, 3), keepdims=True)
        var = jnp.mean((y - mu) ** 2, axis=(0, 2, 3), keepdims=True)
        return ((y - mu) * jax.lax.rsqrt(var + EPS) * g.reshape(1, -1, 1, 1)
                + b_.reshape(1, -1, 1, 1))

    x = x_nchw
    y = jnp.einsum("ec,bchw->behw", p["w1t"], x, precision=hi)
    y = _hswish(bn(y, p["g1"], p["b1"]))

    yp = jnp.pad(y, ((0, 0), (0, 0), (1, 1), (1, 1)))
    acc = jnp.zeros_like(y)
    for t in range(K * K):
        dy, dx = t // K, t % K
        acc = acc + (yp[:, :, dy:dy + H, dx:dx + W]
                     * p["dw"][:, t][None, :, None, None])
    y = bn(acc, p["g2"], p["b2"])

    pooled = jnp.mean(y, axis=(2, 3))                        # (B, EXP)
    hid = jnp.maximum(jnp.dot(pooled, p["wse1t"].T, precision=hi), 0.0)
    se = _hsigmoid(jnp.dot(hid, p["wse2t"].T, precision=hi))
    y = _hswish(y * se[:, :, None, None])

    y = jnp.einsum("oe,behw->bohw", p["w3t"], y, precision=hi)
    y = bn(y, p["g3"], p["b3"])
    return x + y


def init_params(key):
    ks = jax.random.split(key, 11)
    f = jnp.float32
    r = EXP // SE_RED
    return {
        # 1x1 conv / linear weights stored as (out, in) (native PyTorch layout
        # for Linear and squeezed 1x1 Conv2d weights); BN gamma/beta as flat
        # (C,) vectors; depthwise weights as (EXP, K*K) with tap t = ky*K + kx.
        "w1t":   (0.3 * jax.random.normal(ks[0], (EXP, C_IN))).astype(f),
        "g1":    (1.0 + 0.1 * jax.random.normal(ks[1], (EXP,))).astype(f),
        "b1":    (0.1 * jax.random.normal(ks[2], (EXP,))).astype(f),
        "dw":    (0.3 * jax.random.normal(ks[3], (EXP, K * K))).astype(f),
        "g2":    (1.0 + 0.1 * jax.random.normal(ks[4], (EXP,))).astype(f),
        "b2":    (0.1 * jax.random.normal(ks[5], (EXP,))).astype(f),
        "wse1t": (0.3 * jax.random.normal(ks[6], (r, EXP))).astype(f),
        "wse2t": (0.3 * jax.random.normal(ks[7], (EXP, r))).astype(f),
        "w3t":   (0.3 * jax.random.normal(ks[8], (C_OUT, EXP))).astype(f),
        "g3":    (1.0 + 0.1 * jax.random.normal(ks[9], (C_OUT,))).astype(f),
        "b3":    (0.1 * jax.random.normal(ks[10], (C_OUT,))).astype(f),
    }


if __name__ == "__main__":
    key = jax.random.PRNGKey(0)
    kx, kp = jax.random.split(key)
    x = jax.random.normal(kx, (B, C_IN, H, W), jnp.float32)   # NCHW, like PyTorch
    params = init_params(kp)
    pslab = pack_params(params)            # pack once, outside the jitted fwd

    fwd = jax.jit(mobile_bottleneck)
    out = jax.block_until_ready(fwd(x, pslab))
    ref = jax.block_until_ready(reference(x, params))

    assert out.shape == (B, C_OUT, H, W), out.shape
    # Kernel matmuls use default (single-pass bf16) MXU precision per the perf
    # review; the reference uses full f32 (HIGHEST), hence this tolerance.
    assert jnp.allclose(out, ref, atol=5e-2, rtol=5e-2), float(
        jnp.max(jnp.abs(out - ref)))
    print("KERNEL_OK")
</pallas_src>

<mosaic_0001>
module attributes {stable_mosaic.version = 11 : i64} {
  func.func @mobile_bottleneck_kernel(%arg0: memref<2x8x256xf32, #tpu.memory_space<vmem>>, %arg1: memref<16x128xf32, #tpu.memory_space<vmem>>, %arg2: memref<2x8x256xf32, #tpu.memory_space<vmem>>) attributes {dimension_semantics = [], scalar_prefetch = 0 : i64, scratch_operands = 0 : i64, tpu.core_type = #tpu.core_type<tc>} {
    %c0 = arith.constant 0 : index
    %c0_0 = arith.constant 0 : index
    %0 = vector.load %arg1[%c0, %c0_0] : memref<16x128xf32, #tpu.memory_space<vmem>>, vector<16x8xf32>
    %c0_1 = arith.constant 0 : index
    %c8 = arith.constant 8 : index
    %1 = vector.load %arg1[%c0_1, %c8] : memref<16x128xf32, #tpu.memory_space<vmem>>, vector<8x16xf32>
    %c0_2 = arith.constant 0 : index
    %c24 = arith.constant 24 : index
    %2 = vector.load %arg1[%c0_2, %c24] : memref<16x128xf32, #tpu.memory_space<vmem>>, vector<4x16xf32>
    %c0_3 = arith.constant 0 : index
    %c40 = arith.constant 40 : index
    %3 = vector.load %arg1[%c0_3, %c40] : memref<16x128xf32, #tpu.memory_space<vmem>>, vector<16x4xf32>
    %c0_4 = arith.constant 0 : index
    %c64 = arith.constant 64 : index
    %4 = vector.load %arg1[%c0_4, %c64] : memref<16x128xf32, #tpu.memory_space<vmem>>, vector<16x1xf32>
    %c0_5 = arith.constant 0 : index
    %c65 = arith.constant 65 : index
    %5 = vector.load %arg1[%c0_5, %c65] : memref<16x128xf32, #tpu.memory_space<vmem>>, vector<16x1xf32>
    %c0_6 = arith.constant 0 : index
    %c66 = arith.constant 66 : index
    %6 = vector.load %arg1[%c0_6, %c66] : memref<16x128xf32, #tpu.memory_space<vmem>>, vector<16x1xf32>
    %c0_7 = arith.constant 0 : index
    %c67 = arith.constant 67 : index
    %7 = vector.load %arg1[%c0_7, %c67] : memref<16x128xf32, #tpu.memory_space<vmem>>, vector<16x1xf32>
    %c0_8 = arith.constant 0 : index
    %c68 = arith.constant 68 : index
    %8 = vector.load %arg1[%c0_8, %c68] : memref<16x128xf32, #tpu.memory_space<vmem>>, vector<8x1xf32>
    %c0_9 = arith.constant 0 : index
    %c69 = arith.constant 69 : index
    %9 = vector.load %arg1[%c0_9, %c69] : memref<16x128xf32, #tpu.memory_space<vmem>>, vector<8x1xf32>
    %c0_10 = arith.constant 0 : index
    %c0_11 = arith.constant 0 : index
    %c0_12 = arith.constant 0 : index
    %10 = vector.load %arg0[%c0_10, %c0_11, %c0_12] : memref<2x8x256xf32, #tpu.memory_space<vmem>>, vector<1x8x256xf32>
    %11 = vector.shape_cast %10 : vector<1x8x256xf32> to vector<8x256xf32>
    %c1 = arith.constant 1 : index
    %c0_13 = arith.constant 0 : index
    %c0_14 = arith.constant 0 : index
    %12 = vector.load %arg0[%c1, %c0_13, %c0_14] : memref<2x8x256xf32, #tpu.memory_space<vmem>>, vector<1x8x256xf32>
    %13 = vector.shape_cast %12 : vector<1x8x256xf32> to vector<8x256xf32>
    %14 = tpu.concatenate %11, %13 in 1 : vector<8x256xf32>, vector<8x256xf32> -> vector<8x512xf32>
    %cst = arith.constant dense<0.000000e+00> : vector<16x512xf32>
    %15 = tpu.matmul %0, %14, %cst {dimension_numbers = #tpu.dot_dimension_numbers<[1], [0], [0], [1], [0, 0, 1, 1], [], []>} : vector<16x8xf32>, vector<8x512xf32>, vector<16x512xf32> -> vector<16x512xf32>
    %cst_15 = arith.constant dense<0.000000e+00> : vector<16xf32>
    %16 = vector.multi_reduction <add>, %15, %cst_15 [1] : vector<16x512xf32> to vector<16xf32>
    %17 = vector.shape_cast %16 : vector<16xf32> to vector<16x1xf32>
    %cst_16 = arith.constant 0.001953125 : f32
    %18 = vector.broadcast %cst_16 : f32 to vector<16x1xf32>
    %19 = arith.mulf %17, %18 : vector<16x1xf32>
    %20 = vector.broadcast %19 : vector<16x1xf32> to vector<16x512xf32>
    %21 = arith.subf %15, %20 : vector<16x512xf32>
    %22 = arith.mulf %21, %21 : vector<16x512xf32>
    %cst_17 = arith.constant dense<0.000000e+00> : vector<16xf32>
    %23 = vector.multi_reduction <add>, %22, %cst_17 [1] : vector<16x512xf32> to vector<16xf32>
    %24 = vector.shape_cast %23 : vector<16xf32> to vector<16x1xf32>
    %cst_18 = arith.constant 0.001953125 : f32
    %25 = vector.broadcast %cst_18 : f32 to vector<16x1xf32>
    %26 = arith.mulf %24, %25 : vector<16x1xf32>
    %cst_19 = arith.constant 9.99999974E-6 : f32
    %27 = vector.broadcast %cst_19 : f32 to vector<16x1xf32>
    %28 = arith.addf %26, %27 : vector<16x1xf32>
    %29 = math.rsqrt %28 : vector<16x1xf32>
    %30 = arith.mulf %4, %29 : vector<16x1xf32>
    %31 = vector.broadcast %30 : vector<16x1xf32> to vector<16x512xf32>
    %32 = arith.mulf %21, %31 : vector<16x512xf32>
    %33 = vector.broadcast %5 : vector<16x1xf32> to vector<16x512xf32>
    %34 = arith.addf %32, %33 : vector<16x512xf32>
    %cst_20 = arith.constant 3.000000e+00 : f32
    %35 = vector.broadcast %cst_20 : f32 to vector<16x512xf32>
    %36 = arith.addf %34, %35 : vector<16x512xf32>
    %cst_21 = arith.constant 0.000000e+00 : f32
    %cst_22 = arith.constant 6.000000e+00 : f32
    %37 = vector.broadcast %cst_21 : f32 to vector<16x512xf32>
    %38 = arith.maximumf %37, %36 : vector<16x512xf32>
    %39 = vector.broadcast %cst_22 : f32 to vector<16x512xf32>
    %40 = arith.minimumf %39, %38 : vector<16x512xf32>
    %cst_23 = arith.constant 0.166666672 : f32
    %41 = vector.broadcast %cst_23 : f32 to vector<16x512xf32>
    %42 = arith.mulf %40, %41 : vector<16x512xf32>
    %43 = arith.mulf %34, %42 : vector<16x512xf32>
    %44 = tpu.iota {dimensions = array<i32: 1>} : vector<1x512xi32>
    %c255_i32 = arith.constant 255 : i32
    %45 = vector.broadcast %c255_i32 : i32 to vector<1x512xi32>
    %46 = arith.andi %44, %45 : vector<1x512xi32>
    %c4_i32 = arith.constant 4 : i32
    %47 = vector.broadcast %c4_i32 : i32 to vector<1x512xi32>
    %48 = arith.shrsi %46, %47 : vector<1x512xi32>
    %c15_i32 = arith.constant 15 : i32
    %49 = vector.broadcast %c15_i32 : i32 to vector<1x512xi32>
    %50 = arith.andi %44, %49 : vector<1x512xi32>
    %c1_i32 = arith.constant 1 : i32
    %51 = vector.broadcast %c1_i32 : i32 to vector<1x512xi32>
    %52 = arith.cmpi sge, %48, %51 : vector<1x512xi32>
    %c15_i32_24 = arith.constant 15 : i32
    %53 = vector.broadcast %c15_i32_24 : i32 to vector<1x512xi32>
    %54 = arith.cmpi slt, %48, %53 : vector<1x512xi32>
    %c1_i32_25 = arith.constant 1 : i32
    %55 = vector.broadcast %c1_i32_25 : i32 to vector<1x512xi32>
    %56 = arith.cmpi sge, %50, %55 : vector<1x512xi32>
    %c15_i32_26 = arith.constant 15 : i32
    %57 = vector.broadcast %c15_i32_26 : i32 to vector<1x512xi32>
    %58 = arith.cmpi slt, %50, %57 : vector<1x512xi32>
    %c17_i32 = arith.constant 17 : i32
    %59 = tpu.dynamic_rotate %43 by %c17_i32 dim 1 : vector<16x512xf32>, i32 -> vector<16x512xf32>
    %60 = arith.andi %52, %56 : vector<1x512xi1>
    %cst_27 = arith.constant 0.000000e+00 : f32
    %61 = vector.shape_cast %60 : vector<1x512xi1> to vector<1x512xi1>
    %62 = vector.broadcast %61 : vector<1x512xi1> to vector<16x512xi1>
    %63 = vector.broadcast %cst_27 : f32 to vector<16x512xf32>
    %64 = arith.select %62, %59, %63 : vector<16x512xi1>, vector<16x512xf32>
    %c0_28 = arith.constant 0 : index
    %c48 = arith.constant 48 : index
    %65 = vector.load %arg1[%c0_28, %c48] : memref<16x128xf32, #tpu.memory_space<vmem>>, vector<16x1xf32>
    %66 = vector.broadcast %65 : vector<16x1xf32> to vector<16x512xf32>
    %67 = arith.mulf %64, %66 : vector<16x512xf32>
    %c16_i32 = arith.constant 16 : i32
    %68 = tpu.dynamic_rotate %43 by %c16_i32 dim 1 : vector<16x512xf32>, i32 -> vector<16x512xf32>
    %cst_29 = arith.constant 0.000000e+00 : f32
    %69 = vector.shape_cast %52 : vector<1x512xi1> to vector<1x512xi1>
    %70 = vector.broadcast %69 : vector<1x512xi1> to vector<16x512xi1>
    %71 = vector.broadcast %cst_29 : f32 to vector<16x512xf32>
    %72 = arith.select %70, %68, %71 : vector<16x512xi1>, vector<16x512xf32>
    %c0_30 = arith.constant 0 : index
    %c49 = arith.constant 49 : index
    %73 = vector.load %arg1[%c0_30, %c49] : memref<16x128xf32, #tpu.memory_space<vmem>>, vector<16x1xf32>
    %74 = vector.broadcast %73 : vector<16x1xf32> to vector<16x512xf32>
    %75 = arith.mulf %72, %74 : vector<16x512xf32>
    %76 = arith.addf %67, %75 : vector<16x512xf32>
    %c15_i32_31 = arith.constant 15 : i32
    %77 = tpu.dynamic_rotate %43 by %c15_i32_31 dim 1 : vector<16x512xf32>, i32 -> vector<16x512xf32>
    %78 = arith.andi %52, %58 : vector<1x512xi1>
    %cst_32 = arith.constant 0.000000e+00 : f32
    %79 = vector.shape_cast %78 : vector<1x512xi1> to vector<1x512xi1>
    %80 = vector.broadcast %79 : vector<1x512xi1> to vector<16x512xi1>
    %81 = vector.broadcast %cst_32 : f32 to vector<16x512xf32>
    %82 = arith.select %80, %77, %81 : vector<16x512xi1>, vector<16x512xf32>
    %c0_33 = arith.constant 0 : index
    %c50 = arith.constant 50 : index
    %83 = vector.load %arg1[%c0_33, %c50] : memref<16x128xf32, #tpu.memory_space<vmem>>, vector<16x1xf32>
    %84 = vector.broadcast %83 : vector<16x1xf32> to vector<16x512xf32>
    %85 = arith.mulf %82, %84 : vector<16x512xf32>
    %86 = arith.addf %76, %85 : vector<16x512xf32>
    %c1_i32_34 = arith.constant 1 : i32
    %87 = tpu.dynamic_rotate %43 by %c1_i32_34 dim 1 : vector<16x512xf32>, i32 -> vector<16x512xf32>
    %cst_35 = arith.constant 0.000000e+00 : f32
    %88 = vector.shape_cast %56 : vector<1x512xi1> to vector<1x512xi1>
    %89 = vector.broadcast %88 : vector<1x512xi1> to vector<16x512xi1>
    %90 = vector.broadcast %cst_35 : f32 to vector<16x512xf32>
    %91 = arith.select %89, %87, %90 : vector<16x512xi1>, vector<16x512xf32>
    %c0_36 = arith.constant 0 : index
    %c51 = arith.constant 51 : index
    %92 = vector.load %arg1[%c0_36, %c51] : memref<16x128xf32, #tpu.memory_space<vmem>>, vector<16x1xf32>
    %93 = vector.broadcast %92 : vector<16x1xf32> to vector<16x512xf32>
    %94 = arith.mulf %91, %93 : vector<16x512xf32>
    %95 = arith.addf %86, %94 : vector<16x512xf32>
    %c0_37 = arith.constant 0 : index
    %c52 = arith.constant 52 : index
    %96 = vector.load %arg1[%c0_37, %c52] : memref<16x128xf32, #tpu.memory_space<vmem>>, vector<16x1xf32>
    %97 = vector.broadcast %96 : vector<16x1xf32> to vector<16x512xf32>
    %98 = arith.mulf %43, %97 : vector<16x512xf32>
    %99 = arith.addf %95, %98 : vector<16x512xf32>
    %c511_i32 = arith.constant 511 : i32
    %100 = tpu.dynamic_rotate %43 by %c511_i32 dim 1 : vector<16x512xf32>, i32 -> vector<16x512xf32>
    %cst_38 = arith.constant 0.000000e+00 : f32
    %101 = vector.shape_cast %58 : vector<1x512xi1> to vector<1x512xi1>
    %102 = vector.broadcast %101 : vector<1x512xi1> to vector<16x512xi1>
    %103 = vector.broadcast %cst_38 : f32 to vector<16x512xf32>
    %104 = arith.select %102, %100, %103 : vector<16x512xi1>, vector<16x512xf32>
    %c0_39 = arith.constant 0 : index
    %c53 = arith.constant 53 : index
    %105 = vector.load %arg1[%c0_39, %c53] : memref<16x128xf32, #tpu.memory_space<vmem>>, vector<16x1xf32>
    %106 = vector.broadcast %105 : vector<16x1xf32> to vector<16x512xf32>
    %107 = arith.mulf %104, %106 : vector<16x512xf32>
    %108 = arith.addf %99, %107 : vector<16x512xf32>
    %c497_i32 = arith.constant 497 : i32
    %109 = tpu.dynamic_rotate %43 by %c497_i32 dim 1 : vector<16x512xf32>, i32 -> vector<16x512xf32>
    %110 = arith.andi %54, %56 : vector<1x512xi1>
    %cst_40 = arith.constant 0.000000e+00 : f32
    %111 = vector.shape_cast %110 : vector<1x512xi1> to vector<1x512xi1>
    %112 = vector.broadcast %111 : vector<1x512xi1> to vector<16x512xi1>
    %113 = vector.broadcast %cst_40 : f32 to vector<16x512xf32>
    %114 = arith.select %112, %109, %113 : vector<16x512xi1>, vector<16x512xf32>
    %c0_41 = arith.constant 0 : index
    %c54 = arith.constant 54 : index
    %115 = vector.load %arg1[%c0_41, %c54] : memref<16x128xf32, #tpu.memory_space<vmem>>, vector<16x1xf32>
    %116 = vector.broadcast %115 : vector<16x1xf32> to vector<16x512xf32>
    %117 = arith.mulf %114, %116 : vector<16x512xf32>
    %118 = arith.addf %108, %117 : vector<16x512xf32>
    %c496_i32 = arith.constant 496 : i32
    %119 = tpu.dynamic_rotate %43 by %c496_i32 dim 1 : vector<16x512xf32>, i32 -> vector<16x512xf32>
    %cst_42 = arith.constant 0.000000e+00 : f32
    %120 = vector.shape_cast %54 : vector<1x512xi1> to vector<1x512xi1>
    %121 = vector.broadcast %120 : vector<1x512xi1> to vector<16x512xi1>
    %122 = vector.broadcast %cst_42 : f32 to vector<16x512xf32>
    %123 = arith.select %121, %119, %122 : vector<16x512xi1>, vector<16x512xf32>
    %c0_43 = arith.constant 0 : index
    %c55 = arith.constant 55 : index
    %124 = vector.load %arg1[%c0_43, %c55] : memref<16x128xf32, #tpu.memory_space<vmem>>, vector<16x1xf32>
    %125 = vector.broadcast %124 : vector<16x1xf32> to vector<16x512xf32>
    %126 = arith.mulf %123, %125 : vector<16x512xf32>
    %127 = arith.addf %118, %126 : vector<16x512xf32>
    %c495_i32 = arith.constant 495 : i32
    %128 = tpu.dynamic_rotate %43 by %c495_i32 dim 1 : vector<16x512xf32>, i32 -> vector<16x512xf32>
    %129 = arith.andi %54, %58 : vector<1x512xi1>
    %cst_44 = arith.constant 0.000000e+00 : f32
    %130 = vector.shape_cast %129 : vector<1x512xi1> to vector<1x512xi1>
    %131 = vector.broadcast %130 : vector<1x512xi1> to vector<16x512xi1>
    %132 = vector.broadcast %cst_44 : f32 to vector<16x512xf32>
    %133 = arith.select %131, %128, %132 : vector<16x512xi1>, vector<16x512xf32>
    %c0_45 = arith.constant 0 : index
    %c56 = arith.constant 56 : index
    %134 = vector.load %arg1[%c0_45, %c56] : memref<16x128xf32, #tpu.memory_space<vmem>>, vector<16x1xf32>
    %135 = vector.broadcast %134 : vector<16x1xf32> to vector<16x512xf32>
    %136 = arith.mulf %133, %135 : vector<16x512xf32>
    %137 = arith.addf %127, %136 : vector<16x512xf32>
    %cst_46 = arith.constant dense<0.000000e+00> : vector<16xf32>
    %138 = vector.multi_reduction <add>, %137, %cst_46 [1] : vector<16x512xf32> to vector<16xf32>
    %139 = vector.shape_cast %138 : vector<16xf32> to vector<16x1xf32>
    %cst_47 = arith.constant 0.001953125 : f32
    %140 = vector.broadcast %cst_47 : f32 to vector<16x1xf32>
    %141 = arith.mulf %139, %140 : vector<16x1xf32>
    %142 = vector.broadcast %141 : vector<16x1xf32> to vector<16x512xf32>
    %143 = arith.subf %137, %142 : vector<16x512xf32>
    %144 = arith.mulf %143, %143 : vector<16x512xf32>
    %cst_48 = arith.constant dense<0.000000e+00> : vector<16xf32>
    %145 = vector.multi_reduction <add>, %144, %cst_48 [1] : vector<16x512xf32> to vector<16xf32>
    %146 = vector.shape_cast %145 : vector<16xf32> to vector<16x1xf32>
    %cst_49 = arith.constant 0.001953125 : f32
    %147 = vector.broadcast %cst_49 : f32 to vector<16x1xf32>
    %148 = arith.mulf %146, %147 : vector<16x1xf32>
    %cst_50 = arith.constant 9.99999974E-6 : f32
    %149 = vector.broadcast %cst_50 : f32 to vector<16x1xf32>
    %150 = arith.addf %148, %149 : vector<16x1xf32>
    %151 = math.rsqrt %150 : vector<16x1xf32>
    %152 = arith.mulf %6, %151 : vector<16x1xf32>
    %153 = vector.broadcast %152 : vector<16x1xf32> to vector<16x512xf32>
    %154 = arith.mulf %143, %153 : vector<16x512xf32>
    %155 = vector.broadcast %7 : vector<16x1xf32> to vector<16x512xf32>
    %156 = arith.addf %154, %155 : vector<16x512xf32>
    %157 = vector.extract_strided_slice %156 {offsets = [0, 0], sizes = [16, 256], strides = [1, 1]} : vector<16x512xf32> to vector<16x256xf32>
    %cst_51 = arith.constant dense<0.000000e+00> : vector<16xf32>
    %158 = vector.multi_reduction <add>, %157, %cst_51 [1] : vector<16x256xf32> to vector<16xf32>
    %159 = vector.shape_cast %158 : vector<16xf32> to vector<16x1xf32>
    %cst_52 = arith.constant 3.906250e-03 : f32
    %160 = vector.broadcast %cst_52 : f32 to vector<16x1xf32>
    %161 = arith.mulf %159, %160 : vector<16x1xf32>
    %162 = vector.extract_strided_slice %156 {offsets = [0, 256], sizes = [16, 256], strides = [1, 1]} : vector<16x512xf32> to vector<16x256xf32>
    %cst_53 = arith.constant dense<0.000000e+00> : vector<16xf32>
    %163 = vector.multi_reduction <add>, %162, %cst_53 [1] : vector<16x256xf32> to vector<16xf32>
    %164 = vector.shape_cast %163 : vector<16xf32> to vector<16x1xf32>
    %cst_54 = arith.constant 3.906250e-03 : f32
    %165 = vector.broadcast %cst_54 : f32 to vector<16x1xf32>
    %166 = arith.mulf %164, %165 : vector<16x1xf32>
    %167 = tpu.concatenate %161, %166 in 1 : vector<16x1xf32>, vector<16x1xf32> -> vector<16x2xf32>
    %cst_55 = arith.constant dense<0.000000e+00> : vector<4x2xf32>
    %168 = tpu.matmul %2, %167, %cst_55 {dimension_numbers = #tpu.dot_dimension_numbers<[1], [0], [0], [1], [0, 0, 1, 1], [], []>} : vector<4x16xf32>, vector<16x2xf32>, vector<4x2xf32> -> vector<4x2xf32>
    %cst_56 = arith.constant 0.000000e+00 : f32
    %169 = vector.broadcast %cst_56 : f32 to vector<4x2xf32>
    %170 = arith.maximumf %168, %169 : vector<4x2xf32>
    %cst_57 = arith.constant dense<0.000000e+00> : vector<16x2xf32>
    %171 = tpu.matmul %3, %170, %cst_57 {dimension_numbers = #tpu.dot_dimension_numbers<[1], [0], [0], [1], [0, 0, 1, 1], [], []>} : vector<16x4xf32>, vector<4x2xf32>, vector<16x2xf32> -> vector<16x2xf32>
    %cst_58 = arith.constant 3.000000e+00 : f32
    %172 = vector.broadcast %cst_58 : f32 to vector<16x2xf32>
    %173 = arith.addf %171, %172 : vector<16x2xf32>
    %cst_59 = arith.constant 0.000000e+00 : f32
    %cst_60 = arith.constant 6.000000e+00 : f32
    %174 = vector.broadcast %cst_59 : f32 to vector<16x2xf32>
    %175 = arith.maximumf %174, %173 : vector<16x2xf32>
    %176 = vector.broadcast %cst_60 : f32 to vector<16x2xf32>
    %177 = arith.minimumf %176, %175 : vector<16x2xf32>
    %cst_61 = arith.constant 0.166666672 : f32
    %178 = vector.broadcast %cst_61 : f32 to vector<16x2xf32>
    %179 = arith.mulf %177, %178 : vector<16x2xf32>
    %180 = vector.extract_strided_slice %179 {offsets = [0, 0], sizes = [16, 1], strides = [1, 1]} : vector<16x2xf32> to vector<16x1xf32>
    %c256_i32 = arith.constant 256 : i32
    %181 = vector.broadcast %c256_i32 : i32 to vector<1x512xi32>
    %182 = arith.cmpi sge, %44, %181 : vector<1x512xi32>
    %183 = vector.extract_strided_slice %179 {offsets = [0, 1], sizes = [16, 1], strides = [1, 1]} : vector<16x2xf32> to vector<16x1xf32>
    %184 = vector.shape_cast %182 : vector<1x512xi1> to vector<1x512xi1>
    %185 = vector.broadcast %184 : vector<1x512xi1> to vector<16x512xi1>
    %186 = vector.shape_cast %183 : vector<16x1xf32> to vector<16x1xf32>
    %187 = vector.broadcast %186 : vector<16x1xf32> to vector<16x512xf32>
    %188 = vector.shape_cast %180 : vector<16x1xf32> to vector<16x1xf32>
    %189 = vector.broadcast %188 : vector<16x1xf32> to vector<16x512xf32>
    %190 = arith.select %185, %187, %189 : vector<16x512xi1>, vector<16x512xf32>
    %191 = arith.mulf %156, %190 : vector<16x512xf32>
    %cst_62 = arith.constant 3.000000e+00 : f32
    %192 = vector.broadcast %cst_62 : f32 to vector<16x512xf32>
    %193 = arith.addf %191, %192 : vector<16x512xf32>
    %cst_63 = arith.constant 0.000000e+00 : f32
    %cst_64 = arith.constant 6.000000e+00 : f32
    %194 = vector.broadcast %cst_63 : f32 to vector<16x512xf32>
    %195 = arith.maximumf %194, %193 : vector<16x512xf32>
    %196 = vector.broadcast %cst_64 : f32 to vector<16x512xf32>
    %197 = arith.minimumf %196, %195 : vector<16x512xf32>
    %cst_65 = arith.constant 0.166666672 : f32
    %198 = vector.broadcast %cst_65 : f32 to vector<16x512xf32>
    %199 = arith.mulf %197, %198 : vector<16x512xf32>
    %200 = arith.mulf %191, %199 : vector<16x512xf32>
    %cst_66 = arith.constant dense<0.000000e+00> : vector<8x512xf32>
    %201 = tpu.matmul %1, %200, %cst_66 {dimension_numbers = #tpu.dot_dimension_numbers<[1], [0], [0], [1], [0, 0, 1, 1], [], []>} : vector<8x16xf32>, vector<16x512xf32>, vector<8x512xf32> -> vector<8x512xf32>
    %cst_67 = arith.constant dense<0.000000e+00> : vector<8xf32>
    %202 = vector.multi_reduction <add>, %201, %cst_67 [1] : vector<8x512xf32> to vector<8xf32>
    %203 = vector.shape_cast %202 : vector<8xf32> to vector<8x1xf32>
    %cst_68 = arith.constant 0.001953125 : f32
    %204 = vector.broadcast %cst_68 : f32 to vector<8x1xf32>
    %205 = arith.mulf %203, %204 : vector<8x1xf32>
    %206 = vector.broadcast %205 : vector<8x1xf32> to vector<8x512xf32>
    %207 = arith.subf %201, %206 : vector<8x512xf32>
    %208 = arith.mulf %207, %207 : vector<8x512xf32>
    %cst_69 = arith.constant dense<0.000000e+00> : vector<8xf32>
    %209 = vector.multi_reduction <add>, %208, %cst_69 [1] : vector<8x512xf32> to vector<8xf32>
    %210 = vector.shape_cast %209 : vector<8xf32> to vector<8x1xf32>
    %cst_70 = arith.constant 0.001953125 : f32
    %211 = vector.broadcast %cst_70 : f32 to vector<8x1xf32>
    %212 = arith.mulf %210, %211 : vector<8x1xf32>
    %cst_71 = arith.constant 9.99999974E-6 : f32
    %213 = vector.broadcast %cst_71 : f32 to vector<8x1xf32>
    %214 = arith.addf %212, %213 : vector<8x1xf32>
    %215 = math.rsqrt %214 : vector<8x1xf32>
    %216 = arith.mulf %8, %215 : vector<8x1xf32>
    %217 = vector.broadcast %216 : vector<8x1xf32> to vector<8x512xf32>
    %218 = arith.mulf %207, %217 : vector<8x512xf32>
    %219 = vector.broadcast %9 : vector<8x1xf32> to vector<8x512xf32>
    %220 = arith.addf %218, %219 : vector<8x512xf32>
    %c0_72 = arith.constant 0 : index
    %c0_73 = arith.constant 0 : index
    %c0_74 = arith.constant 0 : index
    %221 = vector.load %arg0[%c0_72, %c0_73, %c0_74] : memref<2x8x256xf32, #tpu.memory_space<vmem>>, vector<1x8x256xf32>
    %222 = vector.shape_cast %221 : vector<1x8x256xf32> to vector<8x256xf32>
    %223 = vector.extract_strided_slice %220 {offsets = [0, 0], sizes = [8, 256], strides = [1, 1]} : vector<8x512xf32> to vector<8x256xf32>
    %224 = arith.addf %222, %223 : vector<8x256xf32>
    %c0_75 = arith.constant 0 : index
    %c0_76 = arith.constant 0 : index
    %c0_77 = arith.constant 0 : index
    %225 = vector.load %arg2[%c0_75, %c0_76, %c0_77] : memref<2x8x256xf32, #tpu.memory_space<vmem>>, vector<1x8x256xf32>
    %226 = vector.shape_cast %225 : vector<1x8x256xf32> to vector<8x256xf32>
    %227 = vector.shape_cast %224 : vector<8x256xf32> to vector<1x8x256xf32>
    tpu.vector_store %arg2[%c0_75, %c0_76, %c0_77], %227 {strides = array<i32>} : memref<2x8x256xf32, #tpu.memory_space<vmem>>, vector<1x8x256xf32>,
    %c1_78 = arith.constant 1 : index
    %c0_79 = arith.constant 0 : index
    %c0_80 = arith.constant 0 : index
    %228 = vector.load %arg0[%c1_78, %c0_79, %c0_80] : memref<2x8x256xf32, #tpu.memory_space<vmem>>, vector<1x8x256xf32>
    %229 = vector.shape_cast %228 : vector<1x8x256xf32> to vector<8x256xf32>
    %230 = vector.extract_strided_slice %220 {offsets = [0, 256], sizes = [8, 256], strides = [1, 1]} : vector<8x512xf32> to vector<8x256xf32>
    %231 = arith.addf %229, %230 : vector<8x256xf32>
    %c1_81 = arith.constant 1 : index
    %c0_82 = arith.constant 0 : index
    %c0_83 = arith.constant 0 : index
    %232 = vector.load %arg2[%c1_81, %c0_82, %c0_83] : memref<2x8x256xf32, #tpu.memory_space<vmem>>, vector<1x8x256xf32>
    %233 = vector.shape_cast %232 : vector<1x8x256xf32> to vector<8x256xf32>
    %234 = vector.shape_cast %231 : vector<8x256xf32> to vector<1x8x256xf32>
    tpu.vector_store %arg2[%c1_81, %c0_82, %c0_83], %234 {strides = array<i32>} : memref<2x8x256xf32, #tpu.memory_space<vmem>>, vector<1x8x256xf32>,
    return
  }
}

</mosaic_0001>

<llo_original>
// kernel: mobile_bottleneck.1
$region0: #{mobile_bottleneck.1}
  #allocation0 [shape = 'u32[]', space=smem, size = 0x4, offset = 0x4, fixed_abs, tag = 'smem constant byte address 0x4 - core index']
  #allocation1 [shape = 'u32[144,128]{1,0:T(1,128)}', space=vmem, size = 0x12000, scoped, tag = 'internal scratch']
  %s0 = inlined_call_operand.vmem [shape: f32[2,8,256], index: 0, kind: input, shape index: {}]
  %s1 = inlined_call_operand.vmem [shape: f32[16,128], index: 1, kind: input, shape index: {}]
  %s2 = inlined_call_operand.vmem [shape: f32[2,8,256], index: 2, kind: output, shape index: {}]
  %s3 = sld [smem:[#allocation0]]
  $region18: #{mobile_bottleneck.1} parent=0
    _
  %s5 = ssub.s32 1, %s3
  %s6 = scalar_select 0, %s5, %s3
  // Predicated region
  $region2: #{mobile_bottleneck.1} parent=0 // pred_check
    _
  $region3: #{mobile_bottleneck.1} parent=0 // pred_check_branch
    %8 = sbr.rel (0) target = $region5
  $region4: #{mobile_bottleneck.1} parent=0 // pred_region
    _
  $region5: #{mobile_bottleneck.1} parent=0 // pred_fallthru
    _
  // Predicated region
  $region6: #{mobile_bottleneck.1} parent=0 // pred_check
    _
  $region7: #{mobile_bottleneck.1} parent=0 // pred_check_branch
    %10 = sbr.rel (0) target = $region9
  $region8: #{mobile_bottleneck.1} parent=0 // pred_region
    _
  $region9: #{mobile_bottleneck.1} parent=0 // pred_fallthru
    _
  %v11 = vld [vmem:[%s1] sm:$0xff]
  %v12 = vld [vmem:[%s1 + $0x8] sm:$0xff]
  %v13 = vld [vmem:[%s1] sm:$0xff]
  %v14 = vld [vmem:[%s1] sm:$0xf]
  %v15 = vld [vmem:[%s0] sm:$0xff]
  %v16 = vld [vmem:[%s0 + $0x8] sm:$0xff]
  %s17 = scalar_lea.vmem %s0, 16
  %v18 = vld [vmem:[%s17] sm:$0xff]
  %v19 = vld [vmem:[%s17 + $0x8] sm:$0xff]
  %vm20 = vcmask 64512
  %v22 = vsel %vm20, %v11, 0
  %v25 = vsel %vm20, %v12, 0
  %27 = vmatprep.subr.mxu0 %v16
  %28 = vmatpush1.msra.mxu0 %v15
  %29 = vmatprep.subr.mxu0 0.0
  %30 = vmatpush1.msra.mxu0 0.0
  %31 = vmatprep.subr.mxu0 0.0
  %32 = vmatpush1.msra.mxu0 0.0
  %33 = vmatprep.subr.mxu0 0.0
  %34 = vmatpush1.msra.mxu0 0.0
  %35 = vmatprep.subr.mxu0 0.0
  %36 = vmatpush1.msra.mxu0 0.0
  %37 = vmatprep.subr.mxu0 0.0
  %38 = vmatpush1.msra.mxu0 0.0
  %39 = vmatprep.subr.mxu0 0.0
  %40 = vmatpush1.msra.mxu0 0.0
  %41 = vmatprep.subr.mxu0 0.0
  %42 = vmatpush1.msra.mxu0 0.0
  %43 = vmatprep.subr.mxu0 0.0
  %44 = vmatpush1.msra.mxu0 0.0
  %45 = vmatprep.subr.mxu0 0.0
  %46 = vmatpush1.msra.mxu0 0.0
  %47 = vmatprep.subr.mxu0 0.0
  %48 = vmatpush1.msra.mxu0 0.0
  %49 = vmatprep.subr.mxu0 0.0
  %50 = vmatpush1.msra.mxu0 0.0
  %51 = vmatprep.subr.mxu0 0.0
  %52 = vmatpush1.msra.mxu0 0.0
  %53 = vmatprep.subr.mxu0 0.0
  %54 = vmatpush1.msra.mxu0 0.0
  %55 = vmatprep.subr.mxu0 0.0
  %56 = vmatpush1.msra.mxu0 0.0
  %57 = vmatprep.subr.mxu0 0.0
  %58 = vmatpush1.msra.mxu0 0.0
  %59 = vmatprep.subr.mxu0 0.0
  %60 = vmatpush1.msra.mxu0 0.0
  %61 = vmatprep.subr.mxu0 0.0
  %62 = vmatpush1.msra.mxu0 0.0
  %63 = vmatprep.subr.mxu0 0.0
  %64 = vmatpush1.msra.mxu0 0.0
  %65 = vmatprep.subr.mxu0 0.0
  %66 = vmatpush1.msra.mxu0 0.0
  %67 = vmatprep.subr.mxu0 0.0
  %68 = vmatpush1.msra.mxu0 0.0
  %69 = vmatprep.subr.mxu0 0.0
  %70 = vmatpush1.msra.mxu0 0.0
  %71 = vmatprep.subr.mxu0 0.0
  %72 = vmatpush1.msra.mxu0 0.0
  %73 = vmatprep.subr.mxu0 0.0
  %74 = vmatpush1.msra.mxu0 0.0
  %75 = vmatprep.subr.mxu0 0.0
  %76 = vmatpush1.msra.mxu0 0.0
  %77 = vmatprep.subr.mxu0 0.0
  %78 = vmatpush1.msra.mxu0 0.0
  %79 = vmatprep.subr.mxu0 0.0
  %80 = vmatpush1.msra.mxu0 0.0
  %81 = vmatprep.subr.mxu0 0.0
  %82 = vmatpush1.msra.mxu0 0.0
  %83 = vmatprep.subr.mxu0 0.0
  %84 = vmatpush1.msra.mxu0 0.0
  %85 = vmatprep.subr.mxu0 0.0
  %86 = vmatpush1.msra.mxu0 0.0
  %87 = vmatprep.subr.mxu0 0.0
  %88 = vmatpush1.msra.mxu0 0.0
  %89 = vmatprep.subr.mxu0 0.0
  %90 = vmatpush1.msra.mxu0 0.0
  %91 = vmatprep.mubr.f32.mxu0 0.0
  %92 = vmatmul.mubr.f32.gmra.mrb[0].mxu0 %v22
  %v93 = vpop.f32.mrb[0].mxu0
  %v94 = vadd.f32 0.0, %v93
  %v95 = vpop.f32.mrb[0].mxu0
  %v96 = vadd.f32 0.0, %v95
  %97 = vmatprep.mubr.f32.mxu0 0.0
  %98 = vmatmul.mubr.f32.gmra.mrb[0].mxu0 %v25
  %v99 = vpop.f32.mrb[0].mxu0
  %v100 = vadd.f32 0.0, %v99
  %v101 = vpop.f32.mrb[0].mxu0
  %v102 = vadd.f32 0.0, %v101
  %103 = vdwg.mxu0
  %104 = vmatprep.subr.mxu0 %v19
  %105 = vmatpush1.msra.mxu0 %v18
  %106 = vmatprep.subr.mxu0 0.0
  %107 = vmatpush1.msra.mxu0 0.0
  %108 = vmatprep.subr.mxu0 0.0
  %109 = vmatpush1.msra.mxu0 0.0
  %110 = vmatprep.subr.mxu0 0.0
  %111 = vmatpush1.msra.mxu0 0.0
  %112 = vmatprep.subr.mxu0 0.0
  %113 = vmatpush1.msra.mxu0 0.0
  %114 = vmatprep.subr.mxu0 0.0
  %115 = vmatpush1.msra.mxu0 0.0
  %116 = vmatprep.subr.mxu0 0.0
  %117 = vmatpush1.msra.mxu0 0.0
  %118 = vmatprep.subr.mxu0 0.0
  %119 = vmatpush1.msra.mxu0 0.0
  %120 = vmatprep.subr.mxu0 0.0
  %121 = vmatpush1.msra.mxu0 0.0
  %122 = vmatprep.subr.mxu0 0.0
  %123 = vmatpush1.msra.mxu0 0.0
  %124 = vmatprep.subr.mxu0 0.0
  %125 = vmatpush1.msra.mxu0 0.0
  %126 = vmatprep.subr.mxu0 0.0
  %127 = vmatpush1.msra.mxu0 0.0
  %128 = vmatprep.subr.mxu0 0.0
  %129 = vmatpush1.msra.mxu0 0.0
  %130 = vmatprep.subr.mxu0 0.0
  %131 = vmatpush1.msra.mxu0 0.0
  %132 = vmatprep.subr.mxu0 0.0
  %133 = vmatpush1.msra.mxu0 0.0
  %134 = vmatprep.subr.mxu0 0.0
  %135 = vmatpush1.msra.mxu0 0.0
  %136 = vmatprep.subr.mxu0 0.0
  %137 = vmatpush1.msra.mxu0 0.0
  %138 = vmatprep.subr.mxu0 0.0
  %139 = vmatpush1.msra.mxu0 0.0
  %140 = vmatprep.subr.mxu0 0.0
  %141 = vmatpush1.msra.mxu0 0.0
  %142 = vmatprep.subr.mxu0 0.0
  %143 = vmatpush1.msra.mxu0 0.0
  %144 = vmatprep.subr.mxu0 0.0
  %145 = vmatpush1.msra.mxu0 0.0
  %146 = vmatprep.subr.mxu0 0.0
  %147 = vmatpush1.msra.mxu0 0.0
  %148 = vmatprep.subr.mxu0 0.0
  %149 = vmatpush1.msra.mxu0 0.0
  %150 = vmatprep.subr.mxu0 0.0
  %151 = vmatpush1.msra.mxu0 0.0
  %152 = vmatprep.subr.mxu0 0.0
  %153 = vmatpush1.msra.mxu0 0.0
  %154 = vmatprep.subr.mxu0 0.0
  %155 = vmatpush1.msra.mxu0 0.0
  %156 = vmatprep.subr.mxu0 0.0
  %157 = vmatpush1.msra.mxu0 0.0
  %158 = vmatprep.subr.mxu0 0.0
  %159 = vmatpush1.msra.mxu0 0.0
  %160 = vmatprep.subr.mxu0 0.0
  %161 = vmatpush1.msra.mxu0 0.0
  %162 = vmatprep.subr.mxu0 0.0
  %163 = vmatpush1.msra.mxu0 0.0
  %164 = vmatprep.subr.mxu0 0.0
  %165 = vmatpush1.msra.mxu0 0.0
  %166 = vmatprep.subr.mxu0 0.0
  %167 = vmatpush1.msra.mxu0 0.0
  %168 = vmatprep.mubr.f32.mxu0 0.0
  %169 = vmatmul.mubr.f32.gmra.mrb[0].mxu0 %v22
  %v170 = vpop.f32.mrb[0].mxu0
  %v171 = vadd.f32 0.0, %v170
  %v172 = vpop.f32.mrb[0].mxu0
  %v173 = vadd.f32 0.0, %v172
  %174 = vmatprep.mubr.f32.mxu0 0.0
  %175 = vmatmul.mubr.f32.gmra.mrb[0].mxu0 %v25
  %v176 = vpop.f32.mrb[0].mxu0
  %v177 = vadd.f32 0.0, %v176
  %v178 = vpop.f32.mrb[0].mxu0
  %v179 = vadd.f32 0.0, %v178
  %180 = vdwg.mxu0
  %v181 = vadd.f32 %v94, %v96
  %v182 = vadd.f32 %v181, %v171
  %v183 = vadd.f32 %v182, %v173
  %184 = vadd.xlane.f32.xlu0 %v183
  %v185 = vpop.xlane.xlu0 %184
  %v186 = vadd.f32 %v100, %v102
  %v187 = vadd.f32 %v186, %v177
  %v188 = vadd.f32 %v187, %v179
  %189 = vadd.xlane.f32.xlu0 %v188
  %v190 = vpop.xlane.xlu0 %189
  %v191 = vmul.f32 %v185, 0.001953125
  %v192 = vmul.f32 %v190, 0.001953125
  %v193 = vsub.f32 %v94, %v191
  %v194 = vsub.f32 %v96, %v191
  %v195 = vsub.f32 %v171, %v191
  %v196 = vsub.f32 %v173, %v191
  %v197 = vsub.f32 %v100, %v192
  %v198 = vsub.f32 %v102, %v192
  %v199 = vsub.f32 %v177, %v192
  %v200 = vsub.f32 %v179, %v192
  %v201 = vmul.f32 %v193, %v193
  %v202 = vmul.f32 %v194, %v194
  %v203 = vmul.f32 %v195, %v195
  %v204 = vmul.f32 %v196, %v196
  %v205 = vmul.f32 %v197, %v197
  %v206 = vmul.f32 %v198, %v198
  %v207 = vmul.f32 %v199, %v199
  %v208 = vmul.f32 %v200, %v200
  %v209 = vadd.f32 %v201, %v202
  %v210 = vadd.f32 %v209, %v203
  %v211 = vadd.f32 %v210, %v204
  %212 = vadd.xlane.f32.xlu0 %v211
  %v213 = vpop.xlane.xlu0 %212
  %v214 = vadd.f32 %v205, %v206
  %v215 = vadd.f32 %v214, %v207
  %v216 = vadd.f32 %v215, %v208
  %217 = vadd.xlane.f32.xlu0 %v216
  %v218 = vpop.xlane.xlu0 %217
  %v219 = vmul.f32 %v213, 0.001953125
  %v220 = vmul.f32 %v218, 0.001953125
  %v221 = vadd.f32 %v219, 1e-05
  %v222 = vadd.f32 %v220, 1e-05
  %v223 = vrsqrt.pop %v221
  %v224 = vrsqrt.pop %v222
  %v225 = vmul.f32 %v11, %v223
  %v226 = vmul.f32 %v12, %v224
  %228 = vset.pattern.permute.xlu0 64
  %229 = vperm.xlu0 %228, %v225
  %v230 = vpop.permute.xlu0 %229
  %233 = vset.pattern.permute.xlu0 64
  %234 = vperm.xlu0 %233, %v226
  %v235 = vpop.permute.xlu0 %234
  %v237 = vmul.f32 %v193, %v230
  %v238 = vmul.f32 %v194, %v230
  %v239 = vmul.f32 %v195, %v230
  %v240 = vmul.f32 %v196, %v230
  %v241 = vmul.f32 %v197, %v235
  %v242 = vmul.f32 %v198, %v235
  %v243 = vmul.f32 %v199, %v235
  %v244 = vmul.f32 %v200, %v235
  %245 = vset.pattern.permute.xlu0 65
  %246 = vperm.xlu0 %245, %v11
  %v247 = vpop.permute.xlu0 %246
  %249 = vset.pattern.permute.xlu0 65
  %250 = vperm.xlu0 %249, %v12
  %v251 = vpop.permute.xlu0 %250
  %v253 = vadd.f32 %v237, %v247
  %v254 = vadd.f32 %v238, %v247
  %v255 = vadd.f32 %v239, %v247
  %v256 = vadd.f32 %v240, %v247
  %v257 = vadd.f32 %v241, %v251
  %v258 = vadd.f32 %v242, %v251
  %v259 = vadd.f32 %v243, %v251
  %v260 = vadd.f32 %v244, %v251
  %v261 = vadd.f32 %v253, 3.0
  %v262 = vadd.f32 %v254, 3.0
  %v263 = vadd.f32 %v255, 3.0
  %v264 = vadd.f32 %v256, 3.0
  %v265 = vadd.f32 %v257, 3.0
  %v266 = vadd.f32 %v258, 3.0
  %v267 = vadd.f32 %v259, 3.0
  %v268 = vadd.f32 %v260, 3.0
  %v269 = vmax.f32 %v261, 0.0
  %v270 = vmax.f32 %v262, 0.0
  %v271 = vmax.f32 %v263, 0.0
  %v272 = vmax.f32 %v264, 0.0
  %v273 = vmax.f32 %v265, 0.0
  %v274 = vmax.f32 %v266, 0.0
  %v275 = vmax.f32 %v267, 0.0
  %v276 = vmax.f32 %v268, 0.0
  %v277 = vmin.f32 %v269, 6.0
  %v278 = vmin.f32 %v270, 6.0
  %v279 = vmin.f32 %v271, 6.0
  %v280 = vmin.f32 %v272, 6.0
  %v281 = vmin.f32 %v273, 6.0
  %v282 = vmin.f32 %v274, 6.0
  %v283 = vmin.f32 %v275, 6.0
  %v284 = vmin.f32 %v276, 6.0
  %v285 = vmul.f32 %v277, 0.16666667
  %v286 = vmul.f32 %v278, 0.16666667
  %v287 = vmul.f32 %v279, 0.16666667
  %v288 = vmul.f32 %v280, 0.16666667
  %v289 = vmul.f32 %v281, 0.16666667
  %v290 = vmul.f32 %v282, 0.16666667
  %v291 = vmul.f32 %v283, 0.16666667
  %v292 = vmul.f32 %v284, 0.16666667
  %v293 = vmul.f32 %v253, %v285
  %v294 = vmul.f32 %v254, %v286
  %v295 = vmul.f32 %v255, %v287
  %v296 = vmul.f32 %v256, %v288
  %v297 = vmul.f32 %v257, %v289
  %v298 = vmul.f32 %v258, %v290
  %v299 = vmul.f32 %v259, %v291
  %v300 = vmul.f32 %v260, %v292
  %v301 = vlaneseq
  %v302 = vand.u32 %v301, 127
  %v303 = vadd.s32 %v302, 128
  %v304 = vadd.s32 %v302, 256
  %v305 = vadd.s32 %v302, 384
  %v306 = vand.u32 %v302, 255
  %v307 = vand.u32 %v303, 255
  %v308 = vand.u32 %v304, 255
  %v309 = vand.u32 %v305, 255
  %v310 = vshra.s32 %v306, 4
  %v311 = vshra.s32 %v307, 4
  %v312 = vshra.s32 %v308, 4
  %v313 = vshra.s32 %v309, 4
  %v314 = vand.u32 %v302, 15
  %v315 = vand.u32 %v303, 15
  %v316 = vand.u32 %v304, 15
  %v317 = vand.u32 %v305, 15
  %vm318 = vcmp.ge.s32.totalorder %v310, 1
  %vm319 = vcmp.ge.s32.totalorder %v311, 1
  %vm320 = vcmp.ge.s32.totalorder %v312, 1
  %vm321 = vcmp.ge.s32.totalorder %v313, 1
  %vm322 = vcmp.lt.s32.totalorder %v310, 15
  %vm323 = vcmp.lt.s32.totalorder %v311, 15
  %vm324 = vcmp.lt.s32.totalorder %v312, 15
  %vm325 = vcmp.lt.s32.totalorder %v313, 15
  %vm326 = vcmp.ge.s32.totalorder %v314, 1
  %vm327 = vcmp.ge.s32.totalorder %v315, 1
  %vm328 = vcmp.ge.s32.totalorder %v316, 1
  %vm329 = vcmp.ge.s32.totalorder %v317, 1
  %vm330 = vcmp.lt.s32.totalorder %v314, 15
  %vm331 = vcmp.lt.s32.totalorder %v315, 15
  %vm332 = vcmp.lt.s32.totalorder %v316, 15
  %vm333 = vcmp.lt.s32.totalorder %v317, 15
  %334 = vrot.lane.b32.xlu0 %v293, 17
  %v335 = vpop.permute.xlu0 %334
  %336 = vrot.lane.b32.xlu0 %v297, 17
  %v337 = vpop.permute.xlu0 %336
  %338 = vrot.lane.b32.xlu0 %v294, 17
  %v339 = vpop.permute.xlu0 %338
  %340 = vrot.lane.b32.xlu0 %v298, 17
  %v341 = vpop.permute.xlu0 %340
  %342 = vrot.lane.b32.xlu0 %v295, 17
  %v343 = vpop.permute.xlu0 %342
  %344 = vrot.lane.b32.xlu0 %v299, 17
  %v345 = vpop.permute.xlu0 %344
  %346 = vrot.lane.b32.xlu0 %v296, 17
  %v347 = vpop.permute.xlu0 %346
  %348 = vrot.lane.b32.xlu0 %v300, 17
  %v349 = vpop.permute.xlu0 %348
  %vm350 = vcmp.lt.s32.totalorder %v302, 17
  %v351 = vsel %vm350, %v343, %v347
  %v352 = vsel %vm350, %v345, %v349
  %v353 = vsel %vm350, %v339, %v343
  %v354 = vsel %vm350, %v341, %v345
  %v355 = vsel %vm350, %v335, %v339
  %v356 = vsel %vm350, %v337, %v341
  %v357 = vsel %vm350, %v347, %v335
  %v358 = vsel %vm350, %v349, %v337
  %vm359 = vmand %vm318, %vm326
  %vm360 = vmand %vm319, %vm327
  %vm361 = vmand %vm320, %vm328
  %vm362 = vmand %vm321, %vm329
  %v363 = vsel %vm359, 1, 0
  %v364 = vsel %vm360, 1, 0
  %v365 = vsel %vm361, 1, 0
  %v366 = vsel %vm362, 1, 0
  %vm367 = vcmp.eq.s32.totalorder %v363, 1
  %vm368 = vcmp.eq.s32.totalorder %v364, 1
  %vm369 = vcmp.eq.s32.totalorder %v365, 1
  %vm370 = vcmp.eq.s32.totalorder %v366, 1
  %v371 = vsel %vm367, %v357, 0.0
  %v372 = vsel %vm368, %v355, 0.0
  %v373 = vsel %vm369, %v353, 0.0
  %v374 = vsel %vm370, %v351, 0.0
  %v375 = vsel %vm367, %v358, 0.0
  %v376 = vsel %vm368, %v356, 0.0
  %v377 = vsel %vm369, %v354, 0.0
  %v378 = vsel %vm370, %v352, 0.0
  %379 = vset.pattern.permute.xlu0 48
  %380 = vperm.xlu0 %379, %v11
  %v381 = vpop.permute.xlu0 %380
  %383 = vset.pattern.permute.xlu0 48
  %384 = vperm.xlu0 %383, %v12
  %v385 = vpop.permute.xlu0 %384
  %v387 = vmul.f32 %v371, %v381
  %v388 = vmul.f32 %v372, %v381
  %v389 = vmul.f32 %v373, %v381
  %v390 = vmul.f32 %v374, %v381
  %v391 = vmul.f32 %v375, %v385
  %v392 = vmul.f32 %v376, %v385
  %v393 = vmul.f32 %v377, %v385
  %v394 = vmul.f32 %v378, %v385
  %395 = vrot.lane.b32.xlu0 %v293, 16
  %v396 = vpop.permute.xlu0 %395
  %397 = vrot.lane.b32.xlu0 %v297, 16
  %v398 = vpop.permute.xlu0 %397
  %399 = vrot.lane.b32.xlu0 %v294, 16
  %v400 = vpop.permute.xlu0 %399
  %401 = vrot.lane.b32.xlu0 %v298, 16
  %v402 = vpop.permute.xlu0 %401
  %403 = vrot.lane.b32.xlu0 %v295, 16
  %v404 = vpop.permute.xlu0 %403
  %405 = vrot.lane.b32.xlu0 %v299, 16
  %v406 = vpop.permute.xlu0 %405
  %407 = vrot.lane.b32.xlu0 %v296, 16
  %v408 = vpop.permute.xlu0 %407
  %409 = vrot.lane.b32.xlu0 %v300, 16
  %v410 = vpop.permute.xlu0 %409
  %vm411 = vcmp.lt.s32.totalorder %v302, 16
  %v412 = vsel %vm411, %v404, %v408
  %v413 = vsel %vm411, %v406, %v410
  %v414 = vsel %vm411, %v400, %v404
  %v415 = vsel %vm411, %v402, %v406
  %v416 = vsel %vm411, %v396, %v400
  %v417 = vsel %vm411, %v398, %v402
  %v418 = vsel %vm411, %v408, %v396
  %v419 = vsel %vm411, %v410, %v398
  %v420 = vsel %vm318, 1, 0
  %v421 = vsel %vm319, 1, 0
  %v422 = vsel %vm320, 1, 0
  %v423 = vsel %vm321, 1, 0
  %vm424 = vcmp.eq.s32.totalorder %v420, 1
  %vm425 = vcmp.eq.s32.totalorder %v421, 1
  %vm426 = vcmp.eq.s32.totalorder %v422, 1
  %vm427 = vcmp.eq.s32.totalorder %v423, 1
  %v428 = vsel %vm424, %v418, 0.0
  %v429 = vsel %vm425, %v416, 0.0
  %v430 = vsel %vm426, %v414, 0.0
  %v431 = vsel %vm427, %v412, 0.0
  %v432 = vsel %vm424, %v419, 0.0
  %v433 = vsel %vm425, %v417, 0.0
  %v434 = vsel %vm426, %v415, 0.0
  %v435 = vsel %vm427, %v413, 0.0
  %436 = vset.pattern.permute.xlu0 49
  %437 = vperm.xlu0 %436, %v11
  %v438 = vpop.permute.xlu0 %437
  %440 = vset.pattern.permute.xlu0 49
  %441 = vperm.xlu0 %440, %v12
  %v442 = vpop.permute.xlu0 %441
  %v444 = vmul.f32 %v428, %v438
  %v445 = vmul.f32 %v429, %v438
  %v446 = vmul.f32 %v430, %v438
  %v447 = vmul.f32 %v431, %v438
  %v448 = vmul.f32 %v432, %v442
  %v449 = vmul.f32 %v433, %v442
  %v450 = vmul.f32 %v434, %v442
  %v451 = vmul.f32 %v435, %v442
  %v452 = vadd.f32 %v387, %v444
  %v453 = vadd.f32 %v388, %v445
  %v454 = vadd.f32 %v389, %v446
  %v455 = vadd.f32 %v390, %v447
  %v456 = vadd.f32 %v391, %v448
  %v457 = vadd.f32 %v392, %v449
  %v458 = vadd.f32 %v393, %v450
  %v459 = vadd.f32 %v394, %v451
  %460 = vrot.lane.b32.xlu0 %v293, 15
  %v461 = vpop.permute.xlu0 %460
  %462 = vrot.lane.b32.xlu0 %v297, 15
  %v463 = vpop.permute.xlu0 %462
  %464 = vrot.lane.b32.xlu0 %v294, 15
  %v465 = vpop.permute.xlu0 %464
  %466 = vrot.lane.b32.xlu0 %v298, 15
  %v467 = vpop.permute.xlu0 %466
  %468 = vrot.lane.b32.xlu0 %v295, 15
  %v469 = vpop.permute.xlu0 %468
  %470 = vrot.lane.b32.xlu0 %v299, 15
  %v471 = vpop.permute.xlu0 %470
  %472 = vrot.lane.b32.xlu0 %v296, 15
  %v473 = vpop.permute.xlu0 %472
  %474 = vrot.lane.b32.xlu0 %v300, 15
  %v475 = vpop.permute.xlu0 %474
  %vm476 = vcmp.lt.s32.totalorder %v302, 15
  %v477 = vsel %vm476, %v469, %v473
  %v478 = vsel %vm476, %v471, %v475
  %v479 = vsel %vm476, %v465, %v469
  %v480 = vsel %vm476, %v467, %v471
  %v481 = vsel %vm476, %v461, %v465
  %v482 = vsel %vm476, %v463, %v467
  %v483 = vsel %vm476, %v473, %v461
  %v484 = vsel %vm476, %v475, %v463
  %vm485 = vmand %vm318, %vm330
  %vm486 = vmand %vm319, %vm331
  %vm487 = vmand %vm320, %vm332
  %vm488 = vmand %vm321, %vm333
  %v489 = vsel %vm485, 1, 0
  %v490 = vsel %vm486, 1, 0
  %v491 = vsel %vm487, 1, 0
  %v492 = vsel %vm488, 1, 0
  %vm493 = vcmp.eq.s32.totalorder %v489, 1
  %vm494 = vcmp.eq.s32.totalorder %v490, 1
  %vm495 = vcmp.eq.s32.totalorder %v491, 1
  %vm496 = vcmp.eq.s32.totalorder %v492, 1
  %v497 = vsel %vm493, %v483, 0.0
  %v498 = vsel %vm494, %v481, 0.0
  %v499 = vsel %vm495, %v479, 0.0
  %v500 = vsel %vm496, %v477, 0.0
  %v501 = vsel %vm493, %v484, 0.0
  %v502 = vsel %vm494, %v482, 0.0
  %v503 = vsel %vm495, %v480, 0.0
  %v504 = vsel %vm496, %v478, 0.0
  %505 = vset.pattern.permute.xlu0 50
  %506 = vperm.xlu0 %505, %v11
  %v507 = vpop.permute.xlu0 %506
  %509 = vset.pattern.permute.xlu0 50
  %510 = vperm.xlu0 %509, %v12
  %v511 = vpop.permute.xlu0 %510
  %v513 = vmul.f32 %v497, %v507
  %v514 = vmul.f32 %v498, %v507
  %v515 = vmul.f32 %v499, %v507
  %v516 = vmul.f32 %v500, %v507
  %v517 = vmul.f32 %v501, %v511
  %v518 = vmul.f32 %v502, %v511
  %v519 = vmul.f32 %v503, %v511
  %v520 = vmul.f32 %v504, %v511
  %v521 = vadd.f32 %v452, %v513
  %v522 = vadd.f32 %v453, %v514
  %v523 = vadd.f32 %v454, %v515
  %v524 = vadd.f32 %v455, %v516
  %v525 = vadd.f32 %v456, %v517
  %v526 = vadd.f32 %v457, %v518
  %v527 = vadd.f32 %v458, %v519
  %v528 = vadd.f32 %v459, %v520
  %529 = vrot.lane.b32.xlu0 %v293, 1
  %v530 = vpop.permute.xlu0 %529
  %531 = vrot.lane.b32.xlu0 %v297, 1
  %v532 = vpop.permute.xlu0 %531
  %533 = vrot.lane.b32.xlu0 %v294, 1
  %v534 = vpop.permute.xlu0 %533
  %535 = vrot.lane.b32.xlu0 %v298, 1
  %v536 = vpop.permute.xlu0 %535
  %537 = vrot.lane.b32.xlu0 %v295, 1
  %v538 = vpop.permute.xlu0 %537
  %539 = vrot.lane.b32.xlu0 %v299, 1
  %v540 = vpop.permute.xlu0 %539
  %541 = vrot.lane.b32.xlu0 %v296, 1
  %v542 = vpop.permute.xlu0 %541
  %543 = vrot.lane.b32.xlu0 %v300, 1
  %v544 = vpop.permute.xlu0 %543
  %vm545 = vcmp.lt.s32.totalorder %v302, 1
  %v546 = vsel %vm545, %v538, %v542
  %v547 = vsel %vm545, %v540, %v544
  %v548 = vsel %vm545, %v534, %v538
  %v549 = vsel %vm545, %v536, %v540
  %v550 = vsel %vm545, %v530, %v534
  %v551 = vsel %vm545, %v532, %v536
  %v552 = vsel %vm545, %v542, %v530
  %v553 = vsel %vm545, %v544, %v532
  %v554 = vsel %vm326, 1, 0
  %v555 = vsel %vm327, 1, 0
  %v556 = vsel %vm328, 1, 0
  %v557 = vsel %vm329, 1, 0
  %vm558 = vcmp.eq.s32.totalorder %v554, 1
  %vm559 = vcmp.eq.s32.totalorder %v555, 1
  %vm560 = vcmp.eq.s32.totalorder %v556, 1
  %vm561 = vcmp.eq.s32.totalorder %v557, 1
  %v562 = vsel %vm558, %v552, 0.0
  %v563 = vsel %vm559, %v550, 0.0
  %v564 = vsel %vm560, %v548, 0.0
  %v565 = vsel %vm561, %v546, 0.0
  %v566 = vsel %vm558, %v553, 0.0
  %v567 = vsel %vm559, %v551, 0.0
  %v568 = vsel %vm560, %v549, 0.0
  %v569 = vsel %vm561, %v547, 0.0
  %570 = vset.pattern.permute.xlu0 51
  %571 = vperm.xlu0 %570, %v11
  %v572 = vpop.permute.xlu0 %571
  %574 = vset.pattern.permute.xlu0 51
  %575 = vperm.xlu0 %574, %v12
  %v576 = vpop.permute.xlu0 %575
  %v578 = vmul.f32 %v562, %v572
  %v579 = vmul.f32 %v563, %v572
  %v580 = vmul.f32 %v564, %v572
  %v581 = vmul.f32 %v565, %v572
  %v582 = vmul.f32 %v566, %v576
  %v583 = vmul.f32 %v567, %v576
  %v584 = vmul.f32 %v568, %v576
  %v585 = vmul.f32 %v569, %v576
  %v586 = vadd.f32 %v521, %v578
  %v587 = vadd.f32 %v522, %v579
  %v588 = vadd.f32 %v523, %v580
  %v589 = vadd.f32 %v524, %v581
  %v590 = vadd.f32 %v525, %v582
  %v591 = vadd.f32 %v526, %v583
  %v592 = vadd.f32 %v527, %v584
  %v593 = vadd.f32 %v528, %v585
  %594 = vset.pattern.permute.xlu0 52
  %595 = vperm.xlu0 %594, %v11
  %v596 = vpop.permute.xlu0 %595
  %598 = vset.pattern.permute.xlu0 52
  %599 = vperm.xlu0 %598, %v12
  %v600 = vpop.permute.xlu0 %599
  %v602 = vmul.f32 %v293, %v596
  %v603 = vmul.f32 %v294, %v596
  %v604 = vmul.f32 %v295, %v596
  %v605 = vmul.f32 %v296, %v596
  %v606 = vmul.f32 %v297, %v600
  %v607 = vmul.f32 %v298, %v600
  %v608 = vmul.f32 %v299, %v600
  %v609 = vmul.f32 %v300, %v600
  %v610 = vadd.f32 %v586, %v602
  %v611 = vadd.f32 %v587, %v603
  %v612 = vadd.f32 %v588, %v604
  %v613 = vadd.f32 %v589, %v605
  %v614 = vadd.f32 %v590, %v606
  %v615 = vadd.f32 %v591, %v607
  %v616 = vadd.f32 %v592, %v608
  %v617 = vadd.f32 %v593, %v609
  %618 = vrot.lane.b32.xlu0 %v293, 127
  %v619 = vpop.permute.xlu0 %618
  %620 = vrot.lane.b32.xlu0 %v297, 127
  %v621 = vpop.permute.xlu0 %620
  %622 = vrot.lane.b32.xlu0 %v294, 127
  %v623 = vpop.permute.xlu0 %622
  %624 = vrot.lane.b32.xlu0 %v298, 127
  %v625 = vpop.permute.xlu0 %624
  %626 = vrot.lane.b32.xlu0 %v295, 127
  %v627 = vpop.permute.xlu0 %626
  %628 = vrot.lane.b32.xlu0 %v299, 127
  %v629 = vpop.permute.xlu0 %628
  %630 = vrot.lane.b32.xlu0 %v296, 127
  %v631 = vpop.permute.xlu0 %630
  %632 = vrot.lane.b32.xlu0 %v300, 127
  %v633 = vpop.permute.xlu0 %632
  %vm634 = vcmp.lt.s32.totalorder %v302, 127
  %v635 = vsel %vm634, %v627, %v631
  %v636 = vsel %vm634, %v629, %v633
  %v637 = vsel %vm634, %v623, %v627
  %v638 = vsel %vm634, %v625, %v629
  %v639 = vsel %vm634, %v619, %v623
  %v640 = vsel %vm634, %v621, %v625
  %v641 = vsel %vm634, %v631, %v619
  %v642 = vsel %vm634, %v633, %v621
  %v643 = vsel %vm330, 1, 0
  %v644 = vsel %vm331, 1, 0
  %v645 = vsel %vm332, 1, 0
  %v646 = vsel %vm333, 1, 0
  %vm647 = vcmp.eq.s32.totalorder %v643, 1
  %vm648 = vcmp.eq.s32.totalorder %v644, 1
  %vm649 = vcmp.eq.s32.totalorder %v645, 1
  %vm650 = vcmp.eq.s32.totalorder %v646, 1
  %v651 = vsel %vm647, %v639, 0.0
  %v652 = vsel %vm648, %v637, 0.0
  %v653 = vsel %vm649, %v635, 0.0
  %v654 = vsel %vm650, %v641, 0.0
  %v655 = vsel %vm647, %v640, 0.0
  %v656 = vsel %vm648, %v638, 0.0
  %v657 = vsel %vm649, %v636, 0.0
  %v658 = vsel %vm650, %v642, 0.0
  %659 = vset.pattern.permute.xlu0 53
  %660 = vperm.xlu0 %659, %v11
  %v661 = vpop.permute.xlu0 %660
  %663 = vset.pattern.permute.xlu0 53
  %664 = vperm.xlu0 %663, %v12
  %v665 = vpop.permute.xlu0 %664
  %v667 = vmul.f32 %v651, %v661
  %v668 = vmul.f32 %v652, %v661
  %v669 = vmul.f32 %v653, %v661
  %v670 = vmul.f32 %v654, %v661
  %v671 = vmul.f32 %v655, %v665
  %v672 = vmul.f32 %v656, %v665
  %v673 = vmul.f32 %v657, %v665
  %v674 = vmul.f32 %v658, %v665
  %v675 = vadd.f32 %v610, %v667
  %v676 = vadd.f32 %v611, %v668
  %v677 = vadd.f32 %v612, %v669
  %v678 = vadd.f32 %v613, %v670
  %v679 = vadd.f32 %v614, %v671
  %v680 = vadd.f32 %v615, %v672
  %v681 = vadd.f32 %v616, %v673
  %v682 = vadd.f32 %v617, %v674
  %683 = vrot.lane.b32.xlu0 %v293, 113
  %v684 = vpop.permute.xlu0 %683
  %685 = vrot.lane.b32.xlu0 %v297, 113
  %v686 = vpop.permute.xlu0 %685
  %687 = vrot.lane.b32.xlu0 %v294, 113
  %v688 = vpop.permute.xlu0 %687
  %689 = vrot.lane.b32.xlu0 %v298, 113
  %v690 = vpop.permute.xlu0 %689
  %691 = vrot.lane.b32.xlu0 %v295, 113
  %v692 = vpop.permute.xlu0 %691
  %693 = vrot.lane.b32.xlu0 %v299, 113
  %v694 = vpop.permute.xlu0 %693
  %695 = vrot.lane.b32.xlu0 %v296, 113
  %v696 = vpop.permute.xlu0 %695
  %697 = vrot.lane.b32.xlu0 %v300, 113
  %v698 = vpop.permute.xlu0 %697
  %vm699 = vcmp.lt.s32.totalorder %v302, 113
  %v700 = vsel %vm699, %v692, %v696
  %v701 = vsel %vm699, %v694, %v698
  %v702 = vsel %vm699, %v688, %v692
  %v703 = vsel %vm699, %v690, %v694
  %v704 = vsel %vm699, %v684, %v688
  %v705 = vsel %vm699, %v686, %v690
  %v706 = vsel %vm699, %v696, %v684
  %v707 = vsel %vm699, %v698, %v686
  %vm708 = vmand %vm322, %vm326
  %vm709 = vmand %vm323, %vm327
  %vm710 = vmand %vm324, %vm328
  %vm711 = vmand %vm325, %vm329
  %v712 = vsel %vm708, 1, 0
  %v713 = vsel %vm709, 1, 0
  %v714 = vsel %vm710, 1, 0
  %v715 = vsel %vm711, 1, 0
  %vm716 = vcmp.eq.s32.totalorder %v712, 1
  %vm717 = vcmp.eq.s32.totalorder %v713, 1
  %vm718 = vcmp.eq.s32.totalorder %v714, 1
  %vm719 = vcmp.eq.s32.totalorder %v715, 1
  %v720 = vsel %vm716, %v704, 0.0
  %v721 = vsel %vm717, %v702, 0.0
  %v722 = vsel %vm718, %v700, 0.0
  %v723 = vsel %vm719, %v706, 0.0
  %v724 = vsel %vm716, %v705, 0.0
  %v725 = vsel %vm717, %v703, 0.0
  %v726 = vsel %vm718, %v701, 0.0
  %v727 = vsel %vm719, %v707, 0.0
  %728 = vset.pattern.permute.xlu0 54
  %729 = vperm.xlu0 %728, %v11
  %v730 = vpop.permute.xlu0 %729
  %732 = vset.pattern.permute.xlu0 54
  %733 = vperm.xlu0 %732, %v12
  %v734 = vpop.permute.xlu0 %733
  %v736 = vmul.f32 %v720, %v730
  %v737 = vmul.f32 %v721, %v730
  %v738 = vmul.f32 %v722, %v730
  %v739 = vmul.f32 %v723, %v730
  %v740 = vmul.f32 %v724, %v734
  %v741 = vmul.f32 %v725, %v734
  %v742 = vmul.f32 %v726, %v734
  %v743 = vmul.f32 %v727, %v734
  %v744 = vadd.f32 %v675, %v736
  %v745 = vadd.f32 %v676, %v737
  %v746 = vadd.f32 %v677, %v738
  %v747 = vadd.f32 %v678, %v739
  %v748 = vadd.f32 %v679, %v740
  %v749 = vadd.f32 %v680, %v741
  %v750 = vadd.f32 %v681, %v742
  %v751 = vadd.f32 %v682, %v743
  %752 = vrot.lane.b32.xlu0 %v293, 112
  %v753 = vpop.permute.xlu0 %752
  %754 = vrot.lane.b32.xlu0 %v297, 112
  %v755 = vpop.permute.xlu0 %754
  %756 = vrot.lane.b32.xlu0 %v294, 112
  %v757 = vpop.permute.xlu0 %756
  %758 = vrot.lane.b32.xlu0 %v298, 112
  %v759 = vpop.permute.xlu0 %758
  %760 = vrot.lane.b32.xlu0 %v295, 112
  %v761 = vpop.permute.xlu0 %760
  %762 = vrot.lane.b32.xlu0 %v299, 112
  %v763 = vpop.permute.xlu0 %762
  %764 = vrot.lane.b32.xlu0 %v296, 112
  %v765 = vpop.permute.xlu0 %764
  %766 = vrot.lane.b32.xlu0 %v300, 112
  %v767 = vpop.permute.xlu0 %766
  %vm768 = vcmp.lt.s32.totalorder %v302, 112
  %v769 = vsel %vm768, %v761, %v765
  %v770 = vsel %vm768, %v763, %v767
  %v771 = vsel %vm768, %v757, %v761
  %v772 = vsel %vm768, %v759, %v763
  %v773 = vsel %vm768, %v753, %v757
  %v774 = vsel %vm768, %v755, %v759
  %v775 = vsel %vm768, %v765, %v753
  %v776 = vsel %vm768, %v767, %v755
  %v777 = vsel %vm322, 1, 0
  %v778 = vsel %vm323, 1, 0
  %v779 = vsel %vm324, 1, 0
  %v780 = vsel %vm325, 1, 0
  %vm781 = vcmp.eq.s32.totalorder %v777, 1
  %vm782 = vcmp.eq.s32.totalorder %v778, 1
  %vm783 = vcmp.eq.s32.totalorder %v779, 1
  %vm784 = vcmp.eq.s32.totalorder %v780, 1
  %v785 = vsel %vm781, %v773, 0.0
  %v786 = vsel %vm782, %v771, 0.0
  %v787 = vsel %vm783, %v769, 0.0
  %v788 = vsel %vm784, %v775, 0.0
  %v789 = vsel %vm781, %v774, 0.0
  %v790 = vsel %vm782, %v772, 0.0
  %v791 = vsel %vm783, %v770, 0.0
  %v792 = vsel %vm784, %v776, 0.0
  %793 = vset.pattern.permute.xlu0 55
  %794 = vperm.xlu0 %793, %v11
  %v795 = vpop.permute.xlu0 %794
  %797 = vset.pattern.permute.xlu0 55
  %798 = vperm.xlu0 %797, %v12
  %v799 = vpop.permute.xlu0 %798
  %v801 = vmul.f32 %v785, %v795
  %v802 = vmul.f32 %v786, %v795
  %v803 = vmul.f32 %v787, %v795
  %v804 = vmul.f32 %v788, %v795
  %v805 = vmul.f32 %v789, %v799
  %v806 = vmul.f32 %v790, %v799
  %v807 = vmul.f32 %v791, %v799
  %v808 = vmul.f32 %v792, %v799
  %v809 = vadd.f32 %v744, %v801
  %v810 = vadd.f32 %v745, %v802
  %v811 = vadd.f32 %v746, %v803
  %v812 = vadd.f32 %v747, %v804
  %v813 = vadd.f32 %v748, %v805
  %v814 = vadd.f32 %v749, %v806
  %v815 = vadd.f32 %v750, %v807
  %v816 = vadd.f32 %v751, %v808
  %817 = vrot.lane.b32.xlu0 %v293, 111
  %v818 = vpop.permute.xlu0 %817
  %819 = vrot.lane.b32.xlu0 %v297, 111
  %v820 = vpop.permute.xlu0 %819
  %821 = vrot.lane.b32.xlu0 %v294, 111
  %v822 = vpop.permute.xlu0 %821
  %823 = vrot.lane.b32.xlu0 %v298, 111
  %v824 = vpop.permute.xlu0 %823
  %825 = vrot.lane.b32.xlu0 %v295, 111
  %v826 = vpop.permute.xlu0 %825
  %827 = vrot.lane.b32.xlu0 %v299, 111
  %v828 = vpop.permute.xlu0 %827
  %829 = vrot.lane.b32.xlu0 %v296, 111
  %v830 = vpop.permute.xlu0 %829
  %831 = vrot.lane.b32.xlu0 %v300, 111
  %v832 = vpop.permute.xlu0 %831
  %vm833 = vcmp.lt.s32.totalorder %v302, 111
  %v834 = vsel %vm833, %v826, %v830
  %v835 = vsel %vm833, %v828, %v832
  %v836 = vsel %vm833, %v822, %v826
  %v837 = vsel %vm833, %v824, %v828
  %v838 = vsel %vm833, %v818, %v822
  %v839 = vsel %vm833, %v820, %v824
  %v840 = vsel %vm833, %v830, %v818
  %v841 = vsel %vm833, %v832, %v820
  %vm842 = vmand %vm322, %vm330
  %vm843 = vmand %vm323, %vm331
  %vm844 = vmand %vm324, %vm332
  %vm845 = vmand %vm325, %vm333
  %v846 = vsel %vm842, 1, 0
  %v847 = vsel %vm843, 1, 0
  %v848 = vsel %vm844, 1, 0
  %v849 = vsel %vm845, 1, 0
  %vm850 = vcmp.eq.s32.totalorder %v846, 1
  %vm851 = vcmp.eq.s32.totalorder %v847, 1
  %vm852 = vcmp.eq.s32.totalorder %v848, 1
  %vm853 = vcmp.eq.s32.totalorder %v849, 1
  %v854 = vsel %vm850, %v838, 0.0
  %v855 = vsel %vm851, %v836, 0.0
  %v856 = vsel %vm852, %v834, 0.0
  %v857 = vsel %vm853, %v840, 0.0
  %v858 = vsel %vm850, %v839, 0.0
  %v859 = vsel %vm851, %v837, 0.0
  %v860 = vsel %vm852, %v835, 0.0
  %v861 = vsel %vm853, %v841, 0.0
  %862 = vset.pattern.permute.xlu0 56
  %863 = vperm.xlu0 %862, %v11
  %v864 = vpop.permute.xlu0 %863
  %866 = vset.pattern.permute.xlu0 56
  %867 = vperm.xlu0 %866, %v12
  %v868 = vpop.permute.xlu0 %867
  %v870 = vmul.f32 %v854, %v864
  %v871 = vmul.f32 %v855, %v864
  %v872 = vmul.f32 %v856, %v864
  %v873 = vmul.f32 %v857, %v864
  %v874 = vmul.f32 %v858, %v868
  %v875 = vmul.f32 %v859, %v868
  %v876 = vmul.f32 %v860, %v868
  %v877 = vmul.f32 %v861, %v868
  %v878 = vadd.f32 %v809, %v870
  %v879 = vadd.f32 %v810, %v871
  %v880 = vadd.f32 %v811, %v872
  %v881 = vadd.f32 %v812, %v873
  %v882 = vadd.f32 %v813, %v874
  %v883 = vadd.f32 %v814, %v875
  %v884 = vadd.f32 %v815, %v876
  %v885 = vadd.f32 %v816, %v877
  %v886 = vadd.f32 %v878, %v879
  %v887 = vadd.f32 %v886, %v880
  %v888 = vadd.f32 %v887, %v881
  %889 = vadd.xlane.f32.xlu0 %v888
  %v890 = vpop.xlane.xlu0 %889
  %v891 = vadd.f32 %v882, %v883
  %v892 = vadd.f32 %v891, %v884
  %v893 = vadd.f32 %v892, %v885
  %894 = vadd.xlane.f32.xlu0 %v893
  %v895 = vpop.xlane.xlu0 %894
  %v896 = vmul.f32 %v890, 0.001953125
  %v897 = vmul.f32 %v895, 0.001953125
  %v898 = vsub.f32 %v878, %v896
  %v899 = vsub.f32 %v879, %v896
  %v900 = vsub.f32 %v880, %v896
  %v901 = vsub.f32 %v881, %v896
  %v902 = vsub.f32 %v882, %v897
  %v903 = vsub.f32 %v883, %v897
  %v904 = vsub.f32 %v884, %v897
  %v905 = vsub.f32 %v885, %v897
  %v906 = vmul.f32 %v898, %v898
  %v907 = vmul.f32 %v899, %v899
  %v908 = vmul.f32 %v900, %v900
  %v909 = vmul.f32 %v901, %v901
  %v910 = vmul.f32 %v902, %v902
  %v911 = vmul.f32 %v903, %v903
  %v912 = vmul.f32 %v904, %v904
  %v913 = vmul.f32 %v905, %v905
  %v914 = vadd.f32 %v906, %v907
  %v915 = vadd.f32 %v914, %v908
  %v916 = vadd.f32 %v915, %v909
  %917 = vadd.xlane.f32.xlu0 %v916
  %v918 = vpop.xlane.xlu0 %917
  %v919 = vadd.f32 %v910, %v911
  %v920 = vadd.f32 %v919, %v912
  %v921 = vadd.f32 %v920, %v913
  %922 = vadd.xlane.f32.xlu0 %v921
  %v923 = vpop.xlane.xlu0 %922
  %v924 = vmul.f32 %v918, 0.001953125
  %v925 = vmul.f32 %v923, 0.001953125
  %v926 = vadd.f32 %v924, 1e-05
  %v927 = vadd.f32 %v925, 1e-05
  %v928 = vrsqrt.pop %v926
  %v929 = vrsqrt.pop %v927
  %v930 = vmul.f32 %v11, %v928
  %v931 = vmul.f32 %v12, %v929
  %933 = vset.pattern.permute.xlu0 66
  %934 = vperm.xlu0 %933, %v930
  %v935 = vpop.permute.xlu0 %934
  %938 = vset.pattern.permute.xlu0 66
  %939 = vperm.xlu0 %938, %v931
  %v940 = vpop.permute.xlu0 %939
  %v942 = vmul.f32 %v898, %v935
  %v943 = vmul.f32 %v899, %v935
  %v944 = vmul.f32 %v900, %v935
  %v945 = vmul.f32 %v901, %v935
  %v946 = vmul.f32 %v902, %v940
  %v947 = vmul.f32 %v903, %v940
  %v948 = vmul.f32 %v904, %v940
  %v949 = vmul.f32 %v905, %v940
  %950 = vset.pattern.permute.xlu0 67
  %951 = vperm.xlu0 %950, %v11
  %v952 = vpop.permute.xlu0 %951
  %954 = vset.pattern.permute.xlu0 67
  %955 = vperm.xlu0 %954, %v12
  %v956 = vpop.permute.xlu0 %955
  %v958 = vadd.f32 %v942, %v952
  %v959 = vadd.f32 %v943, %v952
  %v960 = vadd.f32 %v944, %v952
  %v961 = vadd.f32 %v945, %v952
  %v962 = vadd.f32 %v946, %v956
  %v963 = vadd.f32 %v947, %v956
  %v964 = vadd.f32 %v948, %v956
  %v965 = vadd.f32 %v949, %v956
  %v966 = vadd.f32 %v958, %v959
  %967 = vadd.xlane.f32.xlu0 %v966
  %v968 = vpop.xlane.xlu0 %967
  %v969 = vadd.f32 %v962, %v963
  %970 = vadd.xlane.f32.xlu0 %v969
  %v971 = vpop.xlane.xlu0 %970
  %v972 = vmul.f32 %v968, 0.00390625
  %v973 = vmul.f32 %v971, 0.00390625
  %v974 = vadd.f32 %v960, %v961
  %975 = vadd.xlane.f32.xlu0 %v974
  %v976 = vpop.xlane.xlu0 %975
  %v977 = vadd.f32 %v964, %v965
  %978 = vadd.xlane.f32.xlu0 %v977
  %v979 = vpop.xlane.xlu0 %978
  %v980 = vmul.f32 %v976, 0.00390625
  %v981 = vmul.f32 %v979, 0.00390625
  %vm982 = vcmask 7168
  %v983 = vsel %vm982, %v972, %v980
  %v984 = vsel %vm982, %v973, %v981
  %986 = vrot.lane.b32.xlu0 %v14, 104
  %v987 = vpop.permute.xlu0 %986
  %vm988 = vcmask 130048
  %v989 = vsel %vm988, %v987, 0
  %991 = vmatprep.subr.mxu0 0.0
  %992 = vmatpush1.msra.mxu0 %v983
  %993 = vmatprep.subr.mxu0 0.0
  %994 = vmatpush1.msra.mxu0 %v984
  %995 = vmatprep.subr.mxu0 0.0
  %996 = vmatpush1.msra.mxu0 0.0
  %997 = vmatprep.subr.mxu0 0.0
  %998 = vmatpush1.msra.mxu0 0.0
  %999 = vmatprep.subr.mxu0 0.0
  %1000 = vmatpush1.msra.mxu0 0.0
  %1001 = vmatprep.subr.mxu0 0.0
  %1002 = vmatpush1.msra.mxu0 0.0
  %1003 = vmatprep.subr.mxu0 0.0
  %1004 = vmatpush1.msra.mxu0 0.0
  %1005 = vmatprep.subr.mxu0 0.0
  %1006 = vmatpush1.msra.mxu0 0.0
  %1007 = vmatprep.subr.mxu0 0.0
  %1008 = vmatpush1.msra.mxu0 0.0
  %1009 = vmatprep.subr.mxu0 0.0
  %1010 = vmatpush1.msra.mxu0 0.0
  %1011 = vmatprep.subr.mxu0 0.0
  %1012 = vmatpush1.msra.mxu0 0.0
  %1013 = vmatprep.subr.mxu0 0.0
  %1014 = vmatpush1.msra.mxu0 0.0
  %1015 = vmatprep.subr.mxu0 0.0
  %1016 = vmatpush1.msra.mxu0 0.0
  %1017 = vmatprep.subr.mxu0 0.0
  %1018 = vmatpush1.msra.mxu0 0.0
  %1019 = vmatprep.subr.mxu0 0.0
  %1020 = vmatpush1.msra.mxu0 0.0
  %1021 = vmatprep.subr.mxu0 0.0
  %1022 = vmatpush1.msra.mxu0 0.0
  %1023 = vmatprep.subr.mxu0 0.0
  %1024 = vmatpush1.msra.mxu0 0.0
  %1025 = vmatprep.subr.mxu0 0.0
  %1026 = vmatpush1.msra.mxu0 0.0
  %1027 = vmatprep.subr.mxu0 0.0
  %1028 = vmatpush1.msra.mxu0 0.0
  %1029 = vmatprep.subr.mxu0 0.0
  %1030 = vmatpush1.msra.mxu0 0.0
  %1031 = vmatprep.subr.mxu0 0.0
  %1032 = vmatpush1.msra.mxu0 0.0
  %1033 = vmatprep.subr.mxu0 0.0
  %1034 = vmatpush1.msra.mxu0 0.0
  %1035 = vmatprep.subr.mxu0 0.0
  %1036 = vmatpush1.msra.mxu0 0.0
  %1037 = vmatprep.subr.mxu0 0.0
  %1038 = vmatpush1.msra.mxu0 0.0
  %1039 = vmatprep.subr.mxu0 0.0
  %1040 = vmatpush1.msra.mxu0 0.0
  %1041 = vmatprep.subr.mxu0 0.0
  %1042 = vmatpush1.msra.mxu0 0.0
  %1043 = vmatprep.subr.mxu0 0.0
  %1044 = vmatpush1.msra.mxu0 0.0
  %1045 = vmatprep.subr.mxu0 0.0
  %1046 = vmatpush1.msra.mxu0 0.0
  %1047 = vmatprep.subr.mxu0 0.0
  %1048 = vmatpush1.msra.mxu0 0.0
  %1049 = vmatprep.subr.mxu0 0.0
  %1050 = vmatpush1.msra.mxu0 0.0
  %1051 = vmatprep.subr.mxu0 0.0
  %1052 = vmatpush1.msra.mxu0 0.0
  %1053 = vmatprep.subr.mxu0 0.0
  %1054 = vmatpush1.msra.mxu0 0.0
  %1055 = vmatprep.mubr.f32.mxu0 0.0
  %1056 = vmatmul.mubr.f32.gmra.mrb[0].mxu0 %v989
  %v1057 = vpop.f32.mrb[0].mxu0
  %v1058 = vadd.f32 0.0, %v1057
  %v1059 = vpop.f32.mrb[0].mxu0
  %1060 = vdwg.mxu0
  %v1061 = vmax.f32 %v1058, 0.0
  %1062 = vrot.lane.b32.xlu0 %v11, 88
  %v1063 = vpop.permute.xlu0 %1062
  %1064 = vrot.lane.b32.xlu0 %v12, 88
  %v1065 = vpop.permute.xlu0 %1064
  %vm1066 = vcmask 31744
  %v1067 = vsel %vm1066, %v1063, 0
  %v1069 = vsel %vm1066, %v1065, 0
  %vm1071 = vcmask 1043456
  %v1073 = vsel %vm1071, %v1061, 0
  %1075 = vmatprep.subr.mxu0 0.0
  %1076 = vmatpush1.msra.mxu0 %v1073
  %1077 = vmatprep.subr.mxu0 0.0
  %1078 = vmatpush1.msra.mxu0 0.0
  %1079 = vmatprep.subr.mxu0 0.0
  %1080 = vmatpush1.msra.mxu0 0.0
  %1081 = vmatprep.subr.mxu0 0.0
  %1082 = vmatpush1.msra.mxu0 0.0
  %1083 = vmatprep.subr.mxu0 0.0
  %1084 = vmatpush1.msra.mxu0 0.0
  %1085 = vmatprep.subr.mxu0 0.0
  %1086 = vmatpush1.msra.mxu0 0.0
  %1087 = vmatprep.subr.mxu0 0.0
  %1088 = vmatpush1.msra.mxu0 0.0
  %1089 = vmatprep.subr.mxu0 0.0
  %1090 = vmatpush1.msra.mxu0 0.0
  %1091 = vmatprep.subr.mxu0 0.0
  %1092 = vmatpush1.msra.mxu0 0.0
  %1093 = vmatprep.subr.mxu0 0.0
  %1094 = vmatpush1.msra.mxu0 0.0
  %1095 = vmatprep.subr.mxu0 0.0
  %1096 = vmatpush1.msra.mxu0 0.0
  %1097 = vmatprep.subr.mxu0 0.0
  %1098 = vmatpush1.msra.mxu0 0.0
  %1099 = vmatprep.subr.mxu0 0.0
  %1100 = vmatpush1.msra.mxu0 0.0
  %1101 = vmatprep.subr.mxu0 0.0
  %1102 = vmatpush1.msra.mxu0 0.0
  %1103 = vmatprep.subr.mxu0 0.0
  %1104 = vmatpush1.msra.mxu0 0.0
  %1105 = vmatprep.subr.mxu0 0.0
  %1106 = vmatpush1.msra.mxu0 0.0
  %1107 = vmatprep.subr.mxu0 0.0
  %1108 = vmatpush1.msra.mxu0 0.0
  %1109 = vmatprep.subr.mxu0 0.0
  %1110 = vmatpush1.msra.mxu0 0.0
  %1111 = vmatprep.subr.mxu0 0.0
  %1112 = vmatpush1.msra.mxu0 0.0
  %1113 = vmatprep.subr.mxu0 0.0
  %1114 = vmatpush1.msra.mxu0 0.0
  %1115 = vmatprep.subr.mxu0 0.0
  %1116 = vmatpush1.msra.mxu0 0.0
  %1117 = vmatprep.subr.mxu0 0.0
  %1118 = vmatpush1.msra.mxu0 0.0
  %1119 = vmatprep.subr.mxu0 0.0
  %1120 = vmatpush1.msra.mxu0 0.0
  %1121 = vmatprep.subr.mxu0 0.0
  %1122 = vmatpush1.msra.mxu0 0.0
  %1123 = vmatprep.subr.mxu0 0.0
  %1124 = vmatpush1.msra.mxu0 0.0
  %1125 = vmatprep.subr.mxu0 0.0
  %1126 = vmatpush1.msra.mxu0 0.0
  %1127 = vmatprep.subr.mxu0 0.0
  %1128 = vmatpush1.msra.mxu0 0.0
  %1129 = vmatprep.subr.mxu0 0.0
  %1130 = vmatpush1.msra.mxu0 0.0
  %1131 = vmatprep.subr.mxu0 0.0
  %1132 = vmatpush1.msra.mxu0 0.0
  %1133 = vmatprep.subr.mxu0 0.0
  %1134 = vmatpush1.msra.mxu0 0.0
  %1135 = vmatprep.subr.mxu0 0.0
  %1136 = vmatpush1.msra.mxu0 0.0
  %1137 = vmatprep.subr.mxu0 0.0
  %1138 = vmatpush1.msra.mxu0 0.0
  %1139 = vmatprep.mubr.f32.mxu0 0.0
  %1140 = vmatmul.mubr.f32.gmra.mrb[0].mxu0 %v1067
  %v1141 = vpop.f32.mrb[0].mxu0
  %v1142 = vadd.f32 3.0, %v1141
  %v1143 = vpop.f32.mrb[0].mxu0
  %1144 = vmatprep.mubr.f32.mxu0 0.0
  %1145 = vmatmul.mubr.f32.gmra.mrb[0].mxu0 %v1069
  %v1146 = vpop.f32.mrb[0].mxu0
  %v1147 = vadd.f32 3.0, %v1146
  %v1148 = vpop.f32.mrb[0].mxu0
  %1149 = vdwg.mxu0
  %v1150 = vmax.f32 %v1142, 0.0
  %v1151 = vmax.f32 %v1147, 0.0
  %v1152 = vmin.f32 %v1150, 6.0
  %v1153 = vmin.f32 %v1151, 6.0
  %v1154 = vmul.f32 %v1152, 0.16666667
  %v1155 = vmul.f32 %v1153, 0.16666667
  %vm1156 = vcmp.ge.s32.totalorder %v302, 256
  %vm1157 = vcmp.ge.s32.totalorder %v303, 256
  %vm1158 = vcmp.ge.s32.totalorder %v304, 256
  %vm1159 = vcmp.ge.s32.totalorder %v305, 256
  %v1160 = vsel %vm1156, 1, 0
  %v1161 = vsel %vm1157, 1, 0
  %v1162 = vsel %vm1158, 1, 0
  %v1163 = vsel %vm1159, 1, 0
  %vm1164 = vcmp.eq.s32.totalorder %v1160, 1
  %vm1165 = vcmp.eq.s32.totalorder %v1161, 1
  %vm1166 = vcmp.eq.s32.totalorder %v1162, 1
  %vm1167 = vcmp.eq.s32.totalorder %v1163, 1
  %1169 = vset.pattern.permute.xlu0 1
  %1170 = vperm.xlu0 %1169, %v1154
  %v1171 = vpop.permute.xlu0 %1170
  %1174 = vset.pattern.permute.xlu0 1
  %1175 = vperm.xlu0 %1174, %v1155
  %v1176 = vpop.permute.xlu0 %1175
  %1178 = vset.pattern.permute.xlu0 0
  %1179 = vperm.xlu0 %1178, %v1154
  %v1180 = vpop.permute.xlu0 %1179
  %1182 = vset.pattern.permute.xlu0 0
  %1183 = vperm.xlu0 %1182, %v1155
  %v1184 = vpop.permute.xlu0 %1183
  %v1186 = vsel %vm1164, %v1171, %v1180
  %v1187 = vsel %vm1165, %v1171, %v1180
  %v1188 = vsel %vm1166, %v1171, %v1180
  %v1189 = vsel %vm1167, %v1171, %v1180
  %v1190 = vsel %vm1164, %v1176, %v1184
  %v1191 = vsel %vm1165, %v1176, %v1184
  %v1192 = vsel %vm1166, %v1176, %v1184
  %v1193 = vsel %vm1167, %v1176, %v1184
  %v1194 = vmul.f32 %v958, %v1186
  %v1195 = vmul.f32 %v959, %v1187
  %v1196 = vmul.f32 %v960, %v1188
  %v1197 = vmul.f32 %v961, %v1189
  %v1198 = vmul.f32 %v962, %v1190
  %v1199 = vmul.f32 %v963, %v1191
  %v1200 = vmul.f32 %v964, %v1192
  %v1201 = vmul.f32 %v965, %v1193
  %v1202 = vadd.f32 %v1194, 3.0
  %v1203 = vadd.f32 %v1195, 3.0
  %v1204 = vadd.f32 %v1196, 3.0
  %v1205 = vadd.f32 %v1197, 3.0
  %v1206 = vadd.f32 %v1198, 3.0
  %v1207 = vadd.f32 %v1199, 3.0
  %v1208 = vadd.f32 %v1200, 3.0
  %v1209 = vadd.f32 %v1201, 3.0
  %v1210 = vmax.f32 %v1202, 0.0
  %v1211 = vmax.f32 %v1203, 0.0
  %v1212 = vmax.f32 %v1204, 0.0
  %v1213 = vmax.f32 %v1205, 0.0
  %v1214 = vmax.f32 %v1206, 0.0
  %v1215 = vmax.f32 %v1207, 0.0
  %v1216 = vmax.f32 %v1208, 0.0
  %v1217 = vmax.f32 %v1209, 0.0
  %v1218 = vmin.f32 %v1210, 6.0
  %v1219 = vmin.f32 %v1211, 6.0
  %v1220 = vmin.f32 %v1212, 6.0
  %v1221 = vmin.f32 %v1213, 6.0
  %v1222 = vmin.f32 %v1214, 6.0
  %v1223 = vmin.f32 %v1215, 6.0
  %v1224 = vmin.f32 %v1216, 6.0
  %v1225 = vmin.f32 %v1217, 6.0
  %v1226 = vmul.f32 %v1218, 0.16666667
  %v1227 = vmul.f32 %v1219, 0.16666667
  %v1228 = vmul.f32 %v1220, 0.16666667
  %v1229 = vmul.f32 %v1221, 0.16666667
  %v1230 = vmul.f32 %v1222, 0.16666667
  %v1231 = vmul.f32 %v1223, 0.16666667
  %v1232 = vmul.f32 %v1224, 0.16666667
  %v1233 = vmul.f32 %v1225, 0.16666667
  %v1234 = vmul.f32 %v1194, %v1226
  %v1235 = vmul.f32 %v1195, %v1227
  %v1236 = vmul.f32 %v1196, %v1228
  %v1237 = vmul.f32 %v1197, %v1229
  %v1238 = vmul.f32 %v1198, %v1230
  %v1239 = vmul.f32 %v1199, %v1231
  %v1240 = vmul.f32 %v1200, %v1232
  %v1241 = vmul.f32 %v1201, %v1233
  %1243 = vrot.lane.b32.xlu0 %v13, 120
  %v1244 = vpop.permute.xlu0 %1243
  %v1245 = vsel %vm988, %v1244, 0
  %1247 = vmatprep.subr.mxu0 %v1235
  %1248 = vmatpush1.msra.mxu0 %v1234
  %1249 = vmatprep.subr.mxu0 %v1239
  %1250 = vmatpush1.msra.mxu0 %v1238
  %1251 = vmatprep.subr.mxu0 0.0
  %1252 = vmatpush1.msra.mxu0 0.0
  %1253 = vmatprep.subr.mxu0 0.0
  %1254 = vmatpush1.msra.mxu0 0.0
  %1255 = vmatprep.subr.mxu0 0.0
  %1256 = vmatpush1.msra.mxu0 0.0
  %1257 = vmatprep.subr.mxu0 0.0
  %1258 = vmatpush1.msra.mxu0 0.0
  %1259 = vmatprep.subr.mxu0 0.0
  %1260 = vmatpush1.msra.mxu0 0.0
  %1261 = vmatprep.subr.mxu0 0.0
  %1262 = vmatpush1.msra.mxu0 0.0
  %1263 = vmatprep.subr.mxu0 0.0
  %1264 = vmatpush1.msra.mxu0 0.0
  %1265 = vmatprep.subr.mxu0 0.0
  %1266 = vmatpush1.msra.mxu0 0.0
  %1267 = vmatprep.subr.mxu0 0.0
  %1268 = vmatpush1.msra.mxu0 0.0
  %1269 = vmatprep.subr.mxu0 0.0
  %1270 = vmatpush1.msra.mxu0 0.0
  %1271 = vmatprep.subr.mxu0 0.0
  %1272 = vmatpush1.msra.mxu0 0.0
  %1273 = vmatprep.subr.mxu0 0.0
  %1274 = vmatpush1.msra.mxu0 0.0
  %1275 = vmatprep.subr.mxu0 0.0
  %1276 = vmatpush1.msra.mxu0 0.0
  %1277 = vmatprep.subr.mxu0 0.0
  %1278 = vmatpush1.msra.mxu0 0.0
  %1279 = vmatprep.subr.mxu0 0.0
  %1280 = vmatpush1.msra.mxu0 0.0
  %1281 = vmatprep.subr.mxu0 0.0
  %1282 = vmatpush1.msra.mxu0 0.0
  %1283 = vmatprep.subr.mxu0 0.0
  %1284 = vmatpush1.msra.mxu0 0.0
  %1285 = vmatprep.subr.mxu0 0.0
  %1286 = vmatpush1.msra.mxu0 0.0
  %1287 = vmatprep.subr.mxu0 0.0
  %1288 = vmatpush1.msra.mxu0 0.0
  %1289 = vmatprep.subr.mxu0 0.0
  %1290 = vmatpush1.msra.mxu0 0.0
  %1291 = vmatprep.subr.mxu0 0.0
  %1292 = vmatpush1.msra.mxu0 0.0
  %1293 = vmatprep.subr.mxu0 0.0
  %1294 = vmatpush1.msra.mxu0 0.0
  %1295 = vmatprep.subr.mxu0 0.0
  %1296 = vmatpush1.msra.mxu0 0.0
  %1297 = vmatprep.subr.mxu0 0.0
  %1298 = vmatpush1.msra.mxu0 0.0
  %1299 = vmatprep.subr.mxu0 0.0
  %1300 = vmatpush1.msra.mxu0 0.0
  %1301 = vmatprep.subr.mxu0 0.0
  %1302 = vmatpush1.msra.mxu0 0.0
  %1303 = vmatprep.subr.mxu0 0.0
  %1304 = vmatpush1.msra.mxu0 0.0
  %1305 = vmatprep.subr.mxu0 0.0
  %1306 = vmatpush1.msra.mxu0 0.0
  %1307 = vmatprep.subr.mxu0 0.0
  %1308 = vmatpush1.msra.mxu0 0.0
  %1309 = vmatprep.subr.mxu0 0.0
  %1310 = vmatpush1.msra.mxu0 0.0
  %1311 = vmatprep.mubr.f32.mxu0 0.0
  %1312 = vmatmul.mubr.f32.gmra.mrb[0].mxu0 %v1245
  %v1313 = vpop.f32.mrb[0].mxu0
  %v1314 = vadd.f32 0.0, %v1313
  %v1315 = vpop.f32.mrb[0].mxu0
  %v1316 = vadd.f32 0.0, %v1315
  %1317 = vdwg.mxu0
  %1318 = vmatprep.subr.mxu0 %v1237
  %1319 = vmatpush1.msra.mxu0 %v1236
  %1320 = vmatprep.subr.mxu0 %v1241
  %1321 = vmatpush1.msra.mxu0 %v1240
  %1322 = vmatprep.subr.mxu0 0.0
  %1323 = vmatpush1.msra.mxu0 0.0
  %1324 = vmatprep.subr.mxu0 0.0
  %1325 = vmatpush1.msra.mxu0 0.0
  %1326 = vmatprep.subr.mxu0 0.0
  %1327 = vmatpush1.msra.mxu0 0.0
  %1328 = vmatprep.subr.mxu0 0.0
  %1329 = vmatpush1.msra.mxu0 0.0
  %1330 = vmatprep.subr.mxu0 0.0
  %1331 = vmatpush1.msra.mxu0 0.0
  %1332 = vmatprep.subr.mxu0 0.0
  %1333 = vmatpush1.msra.mxu0 0.0
  %1334 = vmatprep.subr.mxu0 0.0
  %1335 = vmatpush1.msra.mxu0 0.0
  %1336 = vmatprep.subr.mxu0 0.0
  %1337 = vmatpush1.msra.mxu0 0.0
  %1338 = vmatprep.subr.mxu0 0.0
  %1339 = vmatpush1.msra.mxu0 0.0
  %1340 = vmatprep.subr.mxu0 0.0
  %1341 = vmatpush1.msra.mxu0 0.0
  %1342 = vmatprep.subr.mxu0 0.0
  %1343 = vmatpush1.msra.mxu0 0.0
  %1344 = vmatprep.subr.mxu0 0.0
  %1345 = vmatpush1.msra.mxu0 0.0
  %1346 = vmatprep.subr.mxu0 0.0
  %1347 = vmatpush1.msra.mxu0 0.0
  %1348 = vmatprep.subr.mxu0 0.0
  %1349 = vmatpush1.msra.mxu0 0.0
  %1350 = vmatprep.subr.mxu0 0.0
  %1351 = vmatpush1.msra.mxu0 0.0
  %1352 = vmatprep.subr.mxu0 0.0
  %1353 = vmatpush1.msra.mxu0 0.0
  %1354 = vmatprep.subr.mxu0 0.0
  %1355 = vmatpush1.msra.mxu0 0.0
  %1356 = vmatprep.subr.mxu0 0.0
  %1357 = vmatpush1.msra.mxu0 0.0
  %1358 = vmatprep.subr.mxu0 0.0
  %1359 = vmatpush1.msra.mxu0 0.0
  %1360 = vmatprep.subr.mxu0 0.0
  %1361 = vmatpush1.msra.mxu0 0.0
  %1362 = vmatprep.subr.mxu0 0.0
  %1363 = vmatpush1.msra.mxu0 0.0
  %1364 = vmatprep.subr.mxu0 0.0
  %1365 = vmatpush1.msra.mxu0 0.0
  %1366 = vmatprep.subr.mxu0 0.0
  %1367 = vmatpush1.msra.mxu0 0.0
  %1368 = vmatprep.subr.mxu0 0.0
  %1369 = vmatpush1.msra.mxu0 0.0
  %1370 = vmatprep.subr.mxu0 0.0
  %1371 = vmatpush1.msra.mxu0 0.0
  %1372 = vmatprep.subr.mxu0 0.0
  %1373 = vmatpush1.msra.mxu0 0.0
  %1374 = vmatprep.subr.mxu0 0.0
  %1375 = vmatpush1.msra.mxu0 0.0
  %1376 = vmatprep.subr.mxu0 0.0
  %1377 = vmatpush1.msra.mxu0 0.0
  %1378 = vmatprep.subr.mxu0 0.0
  %1379 = vmatpush1.msra.mxu0 0.0
  %1380 = vmatprep.subr.mxu0 0.0
  %1381 = vmatpush1.msra.mxu0 0.0
  %1382 = vmatprep.mubr.f32.mxu0 0.0
  %1383 = vmatmul.mubr.f32.gmra.mrb[0].mxu0 %v1245
  %v1384 = vpop.f32.mrb[0].mxu0
  %v1385 = vadd.f32 0.0, %v1384
  %v1386 = vpop.f32.mrb[0].mxu0
  %v1387 = vadd.f32 0.0, %v1386
  %1388 = vdwg.mxu0
  %v1389 = vadd.f32 %v1314, %v1316
  %v1390 = vadd.f32 %v1389, %v1385
  %v1391 = vadd.f32 %v1390, %v1387
  %1392 = vadd.xlane.f32.xlu0 %v1391
  %v1393 = vpop.xlane.xlu0 %1392
  %v1394 = vmul.f32 %v1393, 0.001953125
  %v1395 = vsub.f32 %v1314, %v1394
  %v1396 = vsub.f32 %v1316, %v1394
  %v1397 = vsub.f32 %v1385, %v1394
  %v1398 = vsub.f32 %v1387, %v1394
  %v1399 = vmul.f32 %v1395, %v1395
  %v1400 = vmul.f32 %v1396, %v1396
  %v1401 = vmul.f32 %v1397, %v1397
  %v1402 = vmul.f32 %v1398, %v1398
  %v1403 = vadd.f32 %v1399, %v1400
  %v1404 = vadd.f32 %v1403, %v1401
  %v1405 = vadd.f32 %v1404, %v1402
  %1406 = vadd.xlane.f32.xlu0 %v1405
  %v1407 = vpop.xlane.xlu0 %1406
  %v1408 = vmul.f32 %v1407, 0.001953125
  %v1409 = vadd.f32 %v1408, 1e-05
  %v1410 = vrsqrt.pop %v1409
  %v1411 = vmul.f32 %v13, %v1410
  %1413 = vset.pattern.permute.xlu0 68
  %1414 = vperm.xlu0 %1413, %v1411
  %v1415 = vpop.permute.xlu0 %1414
  %v1417 = vmul.f32 %v1395, %v1415
  %v1418 = vmul.f32 %v1396, %v1415
  %v1419 = vmul.f32 %v1397, %v1415
  %v1420 = vmul.f32 %v1398, %v1415
  %1421 = vset.pattern.permute.xlu0 69
  %1422 = vperm.xlu0 %1421, %v13
  %v1423 = vpop.permute.xlu0 %1422
  %v1425 = vadd.f32 %v1417, %v1423
  %v1426 = vadd.f32 %v1418, %v1423
  %v1427 = vadd.f32 %v1419, %v1423
  %v1428 = vadd.f32 %v1420, %v1423
  %v1429 = vadd.f32 %v15, %v1425
  %v1430 = vadd.f32 %v16, %v1426
  %1431 = vst [vmem:[%s2] sm:$0xff] %v1429
  %1432 = vst [vmem:[%s2 + $0x8] sm:$0xff] %v1430
  %v1433 = vld [vmem:[%s17] sm:$0xff]
  %v1434 = vld [vmem:[%s17 + $0x8] sm:$0xff]
  %v1435 = vadd.f32 %v1433, %v1427
  %v1436 = vadd.f32 %v1434, %v1428
  %s1437 = scalar_lea.vmem %s2, 16
  %1438 = vst [vmem:[%s1437] sm:$0xff] %v1435
  %1439 = vst [vmem:[%s1437 + $0x8] sm:$0xff] %v1436
  // Predicated region
  $region10: #{mobile_bottleneck.1} parent=0 // pred_check
    _
  $region11: #{mobile_bottleneck.1} parent=0 // pred_check_branch
    %1441 = sbr.rel (0) target = $region13
  $region12: #{mobile_bottleneck.1} parent=0 // pred_region
    _
  $region13: #{mobile_bottleneck.1} parent=0 // pred_fallthru
    _
  // Predicated region
  $region14: #{mobile_bottleneck.1} parent=0 // pred_check
    _
  $region15: #{mobile_bottleneck.1} parent=0 // pred_check_branch
    %1443 = sbr.rel (0) target = $region17
  $region16: #{mobile_bottleneck.1} parent=0 // pred_region
    _
  $region17: #{mobile_bottleneck.1} parent=0 // pred_fallthru
    _

</llo_original>
